<compile_context>
chip_gen: v5e
topology: v5e:2x2
jax: 0.10.0
libtpu: 0.0.40
codegen_flags: <defaults>
</compile_context>

<pallas_src>
import functools

import jax
import jax.numpy as jnp
from jax import lax
from jax.experimental import pallas as pl
from jax.experimental.pallas import tpu as pltpu


def _round_up(x, m):
    return (x + m - 1) // m * m


# --------------------------------------------------------------------------- kernel
def _conv_bn_act_kernel(*refs, kh, kw, stride, dilation, relu, has_residual):
    """One output row-tile of conv(KHxKW) + folded-BN bias [+ReLU] [+residual].

    refs: x_tile (1, 1, TH_in, W_pad, Cin)   halo row tile of the padded input
          w      (KH*KW, Cin, Cout)          BN scale already folded in
          bias   (1, Cout)                   f32
          [res   (1, TH, Wo, Cout)]          residual (any dtype)
          out    (1, TH, Wo, Cout)
    """
    if has_residual:
        x_ref, w_ref, b_ref, r_ref, o_ref = refs
    else:
        x_ref, w_ref, b_ref, o_ref = refs
        r_ref = None

    _, th, wo, cout = o_ref.shape
    cin = x_ref.shape[-1]
    m = th * wo

    acc = jnp.zeros((m, cout), jnp.float32)
    t = 0
    for ih in range(kh):
        for iw in range(kw):
            h0, w0 = ih * dilation, iw * dilation
            if stride == 1:
                tap = x_ref[0, 0, pl.ds(h0, th), pl.ds(w0, wo), :]
            else:
                tap = x_ref[0, 0, pl.ds(h0, th, stride), pl.ds(w0, wo, stride), :]
            acc += jnp.dot(tap.reshape(m, cin), w_ref[t],
                           preferred_element_type=jnp.float32)
            t += 1

    y = acc + b_ref[...]                       # folded BN bias
    if relu:
        y = jnp.maximum(y, 0.0)
    if r_ref is not None:                      # fused residual add (no extra HBM pass)
        y = y + r_ref[...].reshape(m, cout).astype(jnp.float32)

    o_ref[...] = y.reshape(1, th, wo, cout).astype(o_ref.dtype)


# --------------------------------------------------------------------------- conv+BN(+act)(+res)
def conv_bn_act_pallas(x_nhwc, w_oihw, gamma, beta, running_mean, running_var, *,
                       stride=1, pad=1, dilation=1, eps=1e-5, relu=True,
                       residual_nhwc=None, out_dtype=None,
                       mxu_dtype=jnp.bfloat16,
                       vmem_budget_bytes=16 * 1024 * 1024,
                       vmem_limit_bytes=32 * 1024 * 1024):
    """Fused Conv2d(bias=False) + eval-mode BatchNorm2d [+ ReLU] [+ residual add]."""
    n, h, w, cin = x_nhwc.shape
    cout, cin_w, kh, kw = w_oihw.shape
    assert cin == cin_w
    # NOTE: matches PSMNet's convbn(): padding = dilation when dilation > 1.
    eff_pad = dilation if dilation > 1 else pad
    out_dtype = x_nhwc.dtype if out_dtype is None else out_dtype

    ho = (h + 2 * eff_pad - dilation * (kh - 1) - 1) // stride + 1
    wo = (w + 2 * eff_pad - dilation * (kw - 1) - 1) // stride + 1
    w_pad_cols = w + 2 * eff_pad
    in_item = jnp.dtype(mxu_dtype).itemsize
    out_item = jnp.dtype(out_dtype).itemsize
    has_res = residual_nhwc is not None
    res_item = jnp.dtype(residual_nhwc.dtype).itemsize if has_res else 0

    # ---- row-tile selection from an explicit, lane-padding-aware VMEM budget.
    lane = lambda c: _round_up(c, 128)     # minormost dim is lane-padded in VMEM

    def step_bytes(d):
        t_in = (d - 1) * stride + (kh - 1) * dilation + 1
        x_b = 2 * t_in * w_pad_cols * lane(cin) * in_item             # dbl-buffered input
        o_b = 2 * d * wo * lane(cout) * out_item                      # dbl-buffered output
        r_b = 2 * d * wo * lane(cout) * res_item if has_res else 0    # dbl-buffered residual
        w_b = 2 * kh * kw * _round_up(cin, 8) * lane(cout) * in_item  # resident weights
        a_b = d * wo * lane(cout) * 4 + t_in * w_pad_cols * lane(cin) * 4  # acc + temps
        return x_b + o_b + r_b + w_b + a_b + (1 << 20)

    divisors = [d for d in range(1, ho + 1) if ho % d == 0]
    fits = [d for d in divisors if step_bytes(d) <= vmem_budget_bytes] or [1]
    good = [d for d in fits if (d * wo) % 8 == 0] or fits    # sublane-friendly M
    want_tiles = 1 if n >= 4 else min(2, ho)                 # enough parallel grid steps
    pref = [d for d in good if ho // d >= want_tiles] or good
    th = max(pref)
    n_t = ho // th
    th_in = (th - 1) * stride + (kh - 1) * dilation + 1

    # ---- HBM-side prep: fold BN, spatial pad, overlapping ("halo") row tiles.
    scale = gamma / jnp.sqrt(running_var + eps)
    bias = (beta - running_mean * scale).reshape(1, cout).astype(jnp.float32)
    w_taps = (jnp.transpose(w_oihw, (2, 3, 1, 0)) * scale)            # (KH,KW,Cin,Cout)
    w_taps = w_taps.reshape(kh * kw, cin, cout).astype(mxu_dtype)

    x_pad = jnp.pad(x_nhwc.astype(mxu_dtype),
                    ((0, 0), (eff_pad, eff_pad), (eff_pad, eff_pad), (0, 0)))
    # (N, n_t, TH_in, W_pad, Cin): each row tile carries its own halo rows.
    tiles = jnp.stack(
        [lax.slice_in_dim(x_pad, j * th * stride, j * th * stride + th_in, axis=1)
         for j in range(n_t)], axis=1)

    args = [tiles, w_taps, bias]
    in_specs = [
        pl.BlockSpec((1, 1, th_in, w_pad_cols, cin), lambda i, j: (i, j, 0, 0, 0)),
        pl.BlockSpec((kh * kw, cin, cout), lambda i, j: (0, 0, 0)),
        pl.BlockSpec((1, cout), lambda i, j: (0, 0)),
    ]
    if has_res:
        assert residual_nhwc.shape == (n, ho, wo, cout), residual_nhwc.shape
        args.append(residual_nhwc)
        in_specs.append(pl.BlockSpec((1, th, wo, cout), lambda i, j: (i, j, 0, 0)))

    flops = 2 * n * ho * wo * kh * kw * cin * cout
    bytes_accessed = (tiles.size * in_item + w_taps.size * in_item + bias.size * 4
                      + n * ho * wo * cout * out_item
                      + (residual_nhwc.size * res_item if has_res else 0))

    kernel = functools.partial(_conv_bn_act_kernel, kh=kh, kw=kw, stride=stride,
                               dilation=dilation, relu=relu, has_residual=has_res)
    return pl.pallas_call(
        kernel,
        out_shape=jax.ShapeDtypeStruct((n, ho, wo, cout), out_dtype),
        grid=(n, n_t),
        in_specs=in_specs,
        out_specs=pl.BlockSpec((1, th, wo, cout), lambda i, j: (i, j, 0, 0)),
        compiler_params=pltpu.CompilerParams(
            dimension_semantics=("parallel", "parallel"),
            vmem_limit_bytes=vmem_limit_bytes),
        cost_estimate=pl.CostEstimate(flops=flops, transcendentals=0,
                                      bytes_accessed=bytes_accessed),
    )(*args)


# --------------------------------------------------------------------------- PSMBasicBlock forward
def psm_basic_block_pallas(x_nchw, params, *, stride=1, pad=1, dilation=1,
                           eps=1e-5, mxu_dtype=jnp.bfloat16):
    """Forward of PSMBasicBlock (eval-mode BatchNorm). NCHW in/out like PyTorch."""
    # TODO(synk): BatchNorm uses running stats (eval mode); training-mode batch
    # statistics are not reproduced.
    (w1, g1, b1, m1, v1) = params["conv1"]
    (w2, g2, b2, m2, v2) = params["conv2"]
    planes = w1.shape[0]
    x_nhwc = jnp.transpose(x_nchw, (0, 2, 3, 1))

    # conv1 output stays in the MXU dtype: it is only consumed by conv2.
    out1 = conv_bn_act_pallas(x_nhwc, w1, g1, b1, m1, v1,
                              stride=stride, pad=pad, dilation=dilation, eps=eps,
                              relu=True, out_dtype=mxu_dtype, mxu_dtype=mxu_dtype)

    ds = params.get("downsample")
    if ds is not None:          # downsample = conv1x1(stride)+BN, same fused kernel
        wd, gd, bd, md, vd = ds
        shortcut = conv_bn_act_pallas(x_nhwc, wd, gd, bd, md, vd,
                                      stride=stride, pad=0, dilation=1, eps=eps,
                                      relu=False, out_dtype=mxu_dtype,
                                      mxu_dtype=mxu_dtype)
    else:
        assert stride == 1 and x_nchw.shape[1] == planes, \
            "identity shortcut requires stride==1 and inplanes==planes"
        shortcut = x_nhwc

    # TODO(synk): conv1+conv2+shortcut could be fused into a single pallas_call
    # (pltpu.emit_pipeline over row tiles, keeping out1 tiles in VMEM); kept as
    # separate fused conv kernels here.
    out = conv_bn_act_pallas(out1, w2, g2, b2, m2, v2,
                             stride=1, pad=pad, dilation=dilation, eps=eps,
                             relu=False, residual_nhwc=shortcut,
                             out_dtype=x_nchw.dtype, mxu_dtype=mxu_dtype)
    return jnp.transpose(out, (0, 3, 1, 2))


# --------------------------------------------------------------------------- pure-JAX reference
def _conv_bn_ref(x, w, gamma, beta, mean, var, stride, pad, dilation, eps):
    p = dilation if dilation > 1 else pad
    y = lax.conv_general_dilated(
        x.astype(jnp.float32), w.astype(jnp.float32),
        window_strides=(stride, stride), padding=[(p, p), (p, p)],
        rhs_dilation=(dilation, dilation),
        dimension_numbers=("NCHW", "OIHW", "NCHW"),
        precision=lax.Precision.HIGHEST)
    s = (gamma / jnp.sqrt(var + eps)).reshape(1, -1, 1, 1)
    b = (beta - mean * gamma / jnp.sqrt(var + eps)).reshape(1, -1, 1, 1)
    return y * s + b


def _reference_block(x, params, *, stride=1, pad=1, dilation=1, eps=1e-5):
    (w1, g1, b1, m1, v1) = params["conv1"]
    (w2, g2, b2, m2, v2) = params["conv2"]
    out = jax.nn.relu(_conv_bn_ref(x, w1, g1, b1, m1, v1, stride, pad, dilation, eps))
    out = _conv_bn_ref(out, w2, g2, b2, m2, v2, 1, pad, dilation, eps)
    ds = params.get("downsample")
    shortcut = x if ds is None else _conv_bn_ref(x, *ds, stride, 0, 1, eps)
    return out + shortcut


# --------------------------------------------------------------------------- demo / self-check
if __name__ == "__main__":
    key = jax.random.PRNGKey(0)

    def bn_params(key_c, c):
        kg, kb, km, kv = jax.random.split(key_c, 4)
        return (jax.random.normal(kg, (c,), jnp.float32) * 0.1 + 1.0,
                jax.random.normal(kb, (c,), jnp.float32) * 0.1,
                jax.random.normal(km, (c,), jnp.float32) * 0.1,
                jax.nn.softplus(jax.random.normal(kv, (c,), jnp.float32)) + 0.5)

    # ----- Test 1: PSMBasicBlock(inplanes=8, planes=8, stride=1, downsample=None)
    N, C, H, W = 2, 8, 16, 16
    k = jax.random.split(key, 8)
    x = jax.random.normal(k[0], (N, C, H, W), jnp.float32)
    w1 = jax.random.normal(k[1], (C, C, 3, 3), jnp.float32) * 0.1
    w2 = jax.random.normal(k[2], (C, C, 3, 3), jnp.float32) * 0.1
    params = {"conv1": (w1, *bn_params(k[3], C)),
              "conv2": (w2, *bn_params(k[4], C)),
              "downsample": None}
    ref = _reference_block(x, params)

    # Exact-precision path (f32 MXU operands): tight check.
    out_f32 = jax.block_until_ready(
        psm_basic_block_pallas(x, params, mxu_dtype=jnp.float32))
    assert out_f32.shape == (N, C, H, W), out_f32.shape
    assert jnp.allclose(out_f32, ref, atol=2e-3, rtol=2e-3), \
        float(jnp.max(jnp.abs(out_f32 - ref)))

    # Default fast path (bf16 MXU operands + bf16 intermediates): loose check.
    out_bf16 = jax.block_until_ready(psm_basic_block_pallas(x, params))
    assert jnp.allclose(out_bf16, ref, atol=2e-1, rtol=5e-2), \
        float(jnp.max(jnp.abs(out_bf16 - ref)))

    # ----- Test 2: with conv1x1+BN downsample (inplanes=8 -> planes=16, stride=1)
    P = 16
    w1b = jax.random.normal(k[5], (P, C, 3, 3), jnp.float32) * 0.1
    w2b = jax.random.normal(k[6], (P, P, 3, 3), jnp.float32) * 0.1
    wdb = jax.random.normal(k[7], (P, C, 1, 1), jnp.float32) * 0.1
    kk = jax.random.split(k[7], 3)
    params2 = {"conv1": (w1b, *bn_params(kk[0], P)),
               "conv2": (w2b, *bn_params(kk[1], P)),
               "downsample": (wdb, *bn_params(kk[2], P))}
    ref2 = _reference_block(x, params2)
    out2 = jax.block_until_ready(
        psm_basic_block_pallas(x, params2, mxu_dtype=jnp.float32))
    assert out2.shape == ref2.shape, out2.shape
    assert jnp.allclose(out2, ref2, atol=2e-3, rtol=2e-3), \
        float(jnp.max(jnp.abs(out2 - ref2)))

    print("KERNEL_OK")
</pallas_src>

<mosaic_0001>
module attributes {stable_mosaic.version = 11 : i64} {
  func.func @_conv_bn_act_kernel(%arg0: i32, %arg1: i32, %arg2: memref<1x1x10x18x8xf32, #tpu.memory_space<vmem>>, %arg3: memref<9x8x8xf32, #tpu.memory_space<vmem>>, %arg4: memref<1x8xf32, #tpu.memory_space<vmem>>, %arg5: memref<1x8x16x8xf32, #tpu.memory_space<vmem>>) attributes {dimension_semantics = [#tpu.dimension_semantics<parallel>, #tpu.dimension_semantics<parallel>], iteration_bounds = array<i64: 2, 2>, scalar_prefetch = 0 : i64, scratch_operands = 0 : i64, tpu.core_type = #tpu.core_type<tc>, window_params = [{transform_indices = @transform_0, window_bounds = array<i64: 1, 1, 10, 18, 8>}, {pipeline_mode = #tpu.pipeline_mode<synchronous>, transform_indices = @transform_1, window_bounds = array<i64: 9, 8, 8>}, {pipeline_mode = #tpu.pipeline_mode<synchronous>, transform_indices = @transform_2, window_bounds = array<i64: 1, 8>}, {transform_indices = @transform_3, window_bounds = array<i64: 1, 8, 16, 8>}]} {
    %cst = arith.constant 0.000000e+00 : f32
    %0 = vector.broadcast %cst : f32 to vector<128x8xf32>
    %c0 = arith.constant 0 : index
    %c0_0 = arith.constant 0 : index
    %c0_1 = arith.constant 0 : index
    %c0_2 = arith.constant 0 : index
    %c0_3 = arith.constant 0 : index
    %1 = vector.load %arg2[%c0, %c0_0, %c0_1, %c0_2, %c0_3] : memref<1x1x10x18x8xf32, #tpu.memory_space<vmem>>, vector<1x1x8x16x8xf32>
    %2 = vector.shape_cast %1 : vector<1x1x8x16x8xf32> to vector<8x16x8xf32>
    %3 = vector.shape_cast %2 : vector<8x16x8xf32> to vector<128x8xf32>
    %c0_4 = arith.constant 0 : index
    %c0_5 = arith.constant 0 : index
    %c0_6 = arith.constant 0 : index
    %4 = vector.load %arg3[%c0_4, %c0_5, %c0_6] : memref<9x8x8xf32, #tpu.memory_space<vmem>>, vector<1x8x8xf32>
    %5 = vector.shape_cast %4 : vector<1x8x8xf32> to vector<8x8xf32>
    %cst_7 = arith.constant dense<0.000000e+00> : vector<128x8xf32>
    %6 = tpu.matmul %3, %5, %cst_7 {dimension_numbers = #tpu.dot_dimension_numbers<[1], [0], [0], [1], [0, 0, 1, 1], [], []>} : vector<128x8xf32>, vector<8x8xf32>, vector<128x8xf32> -> vector<128x8xf32>
    %7 = arith.addf %0, %6 : vector<128x8xf32>
    %c0_8 = arith.constant 0 : index
    %c0_9 = arith.constant 0 : index
    %c0_10 = arith.constant 0 : index
    %c1 = arith.constant 1 : index
    %c0_11 = arith.constant 0 : index
    %8 = vector.load %arg2[%c0_8, %c0_9, %c0_10, %c1, %c0_11] : memref<1x1x10x18x8xf32, #tpu.memory_space<vmem>>, vector<1x1x8x16x8xf32>
    %9 = vector.shape_cast %8 : vector<1x1x8x16x8xf32> to vector<8x16x8xf32>
    %10 = vector.shape_cast %9 : vector<8x16x8xf32> to vector<128x8xf32>
    %c1_12 = arith.constant 1 : index
    %c0_13 = arith.constant 0 : index
    %c0_14 = arith.constant 0 : index
    %11 = vector.load %arg3[%c1_12, %c0_13, %c0_14] : memref<9x8x8xf32, #tpu.memory_space<vmem>>, vector<1x8x8xf32>
    %12 = vector.shape_cast %11 : vector<1x8x8xf32> to vector<8x8xf32>
    %cst_15 = arith.constant dense<0.000000e+00> : vector<128x8xf32>
    %13 = tpu.matmul %10, %12, %cst_15 {dimension_numbers = #tpu.dot_dimension_numbers<[1], [0], [0], [1], [0, 0, 1, 1], [], []>} : vector<128x8xf32>, vector<8x8xf32>, vector<128x8xf32> -> vector<128x8xf32>
    %14 = arith.addf %7, %13 : vector<128x8xf32>
    %c0_16 = arith.constant 0 : index
    %c0_17 = arith.constant 0 : index
    %c0_18 = arith.constant 0 : index
    %c2 = arith.constant 2 : index
    %c0_19 = arith.constant 0 : index
    %15 = vector.load %arg2[%c0_16, %c0_17, %c0_18, %c2, %c0_19] : memref<1x1x10x18x8xf32, #tpu.memory_space<vmem>>, vector<1x1x8x16x8xf32>
    %16 = vector.shape_cast %15 : vector<1x1x8x16x8xf32> to vector<8x16x8xf32>
    %17 = vector.shape_cast %16 : vector<8x16x8xf32> to vector<128x8xf32>
    %c2_20 = arith.constant 2 : index
    %c0_21 = arith.constant 0 : index
    %c0_22 = arith.constant 0 : index
    %18 = vector.load %arg3[%c2_20, %c0_21, %c0_22] : memref<9x8x8xf32, #tpu.memory_space<vmem>>, vector<1x8x8xf32>
    %19 = vector.shape_cast %18 : vector<1x8x8xf32> to vector<8x8xf32>
    %cst_23 = arith.constant dense<0.000000e+00> : vector<128x8xf32>
    %20 = tpu.matmul %17, %19, %cst_23 {dimension_numbers = #tpu.dot_dimension_numbers<[1], [0], [0], [1], [0, 0, 1, 1], [], []>} : vector<128x8xf32>, vector<8x8xf32>, vector<128x8xf32> -> vector<128x8xf32>
    %21 = arith.addf %14, %20 : vector<128x8xf32>
    %c0_24 = arith.constant 0 : index
    %c0_25 = arith.constant 0 : index
    %c1_26 = arith.constant 1 : index
    %c0_27 = arith.constant 0 : index
    %c0_28 = arith.constant 0 : index
    %22 = vector.load %arg2[%c0_24, %c0_25, %c1_26, %c0_27, %c0_28] : memref<1x1x10x18x8xf32, #tpu.memory_space<vmem>>, vector<1x1x8x16x8xf32>
    %23 = vector.shape_cast %22 : vector<1x1x8x16x8xf32> to vector<8x16x8xf32>
    %24 = vector.shape_cast %23 : vector<8x16x8xf32> to vector<128x8xf32>
    %c3 = arith.constant 3 : index
    %c0_29 = arith.constant 0 : index
    %c0_30 = arith.constant 0 : index
    %25 = vector.load %arg3[%c3, %c0_29, %c0_30] : memref<9x8x8xf32, #tpu.memory_space<vmem>>, vector<1x8x8xf32>
    %26 = vector.shape_cast %25 : vector<1x8x8xf32> to vector<8x8xf32>
    %cst_31 = arith.constant dense<0.000000e+00> : vector<128x8xf32>
    %27 = tpu.matmul %24, %26, %cst_31 {dimension_numbers = #tpu.dot_dimension_numbers<[1], [0], [0], [1], [0, 0, 1, 1], [], []>} : vector<128x8xf32>, vector<8x8xf32>, vector<128x8xf32> -> vector<128x8xf32>
    %28 = arith.addf %21, %27 : vector<128x8xf32>
    %c0_32 = arith.constant 0 : index
    %c0_33 = arith.constant 0 : index
    %c1_34 = arith.constant 1 : index
    %c1_35 = arith.constant 1 : index
    %c0_36 = arith.constant 0 : index
    %29 = vector.load %arg2[%c0_32, %c0_33, %c1_34, %c1_35, %c0_36] : memref<1x1x10x18x8xf32, #tpu.memory_space<vmem>>, vector<1x1x8x16x8xf32>
    %30 = vector.shape_cast %29 : vector<1x1x8x16x8xf32> to vector<8x16x8xf32>
    %31 = vector.shape_cast %30 : vector<8x16x8xf32> to vector<128x8xf32>
    %c4 = arith.constant 4 : index
    %c0_37 = arith.constant 0 : index
    %c0_38 = arith.constant 0 : index
    %32 = vector.load %arg3[%c4, %c0_37, %c0_38] : memref<9x8x8xf32, #tpu.memory_space<vmem>>, vector<1x8x8xf32>
    %33 = vector.shape_cast %32 : vector<1x8x8xf32> to vector<8x8xf32>
    %cst_39 = arith.constant dense<0.000000e+00> : vector<128x8xf32>
    %34 = tpu.matmul %31, %33, %cst_39 {dimension_numbers = #tpu.dot_dimension_numbers<[1], [0], [0], [1], [0, 0, 1, 1], [], []>} : vector<128x8xf32>, vector<8x8xf32>, vector<128x8xf32> -> vector<128x8xf32>
    %35 = arith.addf %28, %34 : vector<128x8xf32>
    %c0_40 = arith.constant 0 : index
    %c0_41 = arith.constant 0 : index
    %c1_42 = arith.constant 1 : index
    %c2_43 = arith.constant 2 : index
    %c0_44 = arith.constant 0 : index
    %36 = vector.load %arg2[%c0_40, %c0_41, %c1_42, %c2_43, %c0_44] : memref<1x1x10x18x8xf32, #tpu.memory_space<vmem>>, vector<1x1x8x16x8xf32>
    %37 = vector.shape_cast %36 : vector<1x1x8x16x8xf32> to vector<8x16x8xf32>
    %38 = vector.shape_cast %37 : vector<8x16x8xf32> to vector<128x8xf32>
    %c5 = arith.constant 5 : index
    %c0_45 = arith.constant 0 : index
    %c0_46 = arith.constant 0 : index
    %39 = vector.load %arg3[%c5, %c0_45, %c0_46] : memref<9x8x8xf32, #tpu.memory_space<vmem>>, vector<1x8x8xf32>
    %40 = vector.shape_cast %39 : vector<1x8x8xf32> to vector<8x8xf32>
    %cst_47 = arith.constant dense<0.000000e+00> : vector<128x8xf32>
    %41 = tpu.matmul %38, %40, %cst_47 {dimension_numbers = #tpu.dot_dimension_numbers<[1], [0], [0], [1], [0, 0, 1, 1], [], []>} : vector<128x8xf32>, vector<8x8xf32>, vector<128x8xf32> -> vector<128x8xf32>
    %42 = arith.addf %35, %41 : vector<128x8xf32>
    %c0_48 = arith.constant 0 : index
    %c0_49 = arith.constant 0 : index
    %c2_50 = arith.constant 2 : index
    %c0_51 = arith.constant 0 : index
    %c0_52 = arith.constant 0 : index
    %43 = vector.load %arg2[%c0_48, %c0_49, %c2_50, %c0_51, %c0_52] : memref<1x1x10x18x8xf32, #tpu.memory_space<vmem>>, vector<1x1x8x16x8xf32>
    %44 = vector.shape_cast %43 : vector<1x1x8x16x8xf32> to vector<8x16x8xf32>
    %45 = vector.shape_cast %44 : vector<8x16x8xf32> to vector<128x8xf32>
    %c6 = arith.constant 6 : index
    %c0_53 = arith.constant 0 : index
    %c0_54 = arith.constant 0 : index
    %46 = vector.load %arg3[%c6, %c0_53, %c0_54] : memref<9x8x8xf32, #tpu.memory_space<vmem>>, vector<1x8x8xf32>
    %47 = vector.shape_cast %46 : vector<1x8x8xf32> to vector<8x8xf32>
    %cst_55 = arith.constant dense<0.000000e+00> : vector<128x8xf32>
    %48 = tpu.matmul %45, %47, %cst_55 {dimension_numbers = #tpu.dot_dimension_numbers<[1], [0], [0], [1], [0, 0, 1, 1], [], []>} : vector<128x8xf32>, vector<8x8xf32>, vector<128x8xf32> -> vector<128x8xf32>
    %49 = arith.addf %42, %48 : vector<128x8xf32>
    %c0_56 = arith.constant 0 : index
    %c0_57 = arith.constant 0 : index
    %c2_58 = arith.constant 2 : index
    %c1_59 = arith.constant 1 : index
    %c0_60 = arith.constant 0 : index
    %50 = vector.load %arg2[%c0_56, %c0_57, %c2_58, %c1_59, %c0_60] : memref<1x1x10x18x8xf32, #tpu.memory_space<vmem>>, vector<1x1x8x16x8xf32>
    %51 = vector.shape_cast %50 : vector<1x1x8x16x8xf32> to vector<8x16x8xf32>
    %52 = vector.shape_cast %51 : vector<8x16x8xf32> to vector<128x8xf32>
    %c7 = arith.constant 7 : index
    %c0_61 = arith.constant 0 : index
    %c0_62 = arith.constant 0 : index
    %53 = vector.load %arg3[%c7, %c0_61, %c0_62] : memref<9x8x8xf32, #tpu.memory_space<vmem>>, vector<1x8x8xf32>
    %54 = vector.shape_cast %53 : vector<1x8x8xf32> to vector<8x8xf32>
    %cst_63 = arith.constant dense<0.000000e+00> : vector<128x8xf32>
    %55 = tpu.matmul %52, %54, %cst_63 {dimension_numbers = #tpu.dot_dimension_numbers<[1], [0], [0], [1], [0, 0, 1, 1], [], []>} : vector<128x8xf32>, vector<8x8xf32>, vector<128x8xf32> -> vector<128x8xf32>
    %56 = arith.addf %49, %55 : vector<128x8xf32>
    %c0_64 = arith.constant 0 : index
    %c0_65 = arith.constant 0 : index
    %c2_66 = arith.constant 2 : index
    %c2_67 = arith.constant 2 : index
    %c0_68 = arith.constant 0 : index
    %57 = vector.load %arg2[%c0_64, %c0_65, %c2_66, %c2_67, %c0_68] : memref<1x1x10x18x8xf32, #tpu.memory_space<vmem>>, vector<1x1x8x16x8xf32>
    %58 = vector.shape_cast %57 : vector<1x1x8x16x8xf32> to vector<8x16x8xf32>
    %59 = vector.shape_cast %58 : vector<8x16x8xf32> to vector<128x8xf32>
    %c8 = arith.constant 8 : index
    %c0_69 = arith.constant 0 : index
    %c0_70 = arith.constant 0 : index
    %60 = vector.load %arg3[%c8, %c0_69, %c0_70] : memref<9x8x8xf32, #tpu.memory_space<vmem>>, vector<1x8x8xf32>
    %61 = vector.shape_cast %60 : vector<1x8x8xf32> to vector<8x8xf32>
    %cst_71 = arith.constant dense<0.000000e+00> : vector<128x8xf32>
    %62 = tpu.matmul %59, %61, %cst_71 {dimension_numbers = #tpu.dot_dimension_numbers<[1], [0], [0], [1], [0, 0, 1, 1], [], []>} : vector<128x8xf32>, vector<8x8xf32>, vector<128x8xf32> -> vector<128x8xf32>
    %63 = arith.addf %56, %62 : vector<128x8xf32>
    %c0_72 = arith.constant 0 : index
    %c0_73 = arith.constant 0 : index
    %64 = vector.load %arg4[%c0_72, %c0_73] : memref<1x8xf32, #tpu.memory_space<vmem>>, vector<1x8xf32>
    %65 = vector.broadcast %64 : vector<1x8xf32> to vector<128x8xf32>
    %66 = arith.addf %63, %65 : vector<128x8xf32>
    %cst_74 = arith.constant 0.000000e+00 : f32
    %67 = vector.broadcast %cst_74 : f32 to vector<128x8xf32>
    %68 = arith.maximumf %66, %67 : vector<128x8xf32>
    %69 = vector.shape_cast %68 : vector<128x8xf32> to vector<1x8x16x8xf32>
    %c0_75 = arith.constant 0 : index
    %c0_76 = arith.constant 0 : index
    %c0_77 = arith.constant 0 : index
    %c0_78 = arith.constant 0 : index
    %70 = vector.load %arg5[%c0_75, %c0_76, %c0_77, %c0_78] : memref<1x8x16x8xf32, #tpu.memory_space<vmem>>, vector<1x8x16x8xf32>
    tpu.vector_store %arg5[%c0_75, %c0_76, %c0_77, %c0_78], %69 {strides = array<i32>} : memref<1x8x16x8xf32, #tpu.memory_space<vmem>>, vector<1x8x16x8xf32>,
    return
  }
  func.func @transform_0(%arg0: i32, %arg1: i32) -> (i32, i32, i32, i32, i32) {
    %c0_i32 = arith.constant 0 : i32
    %c0_i32_0 = arith.constant 0 : i32
    %c0_i32_1 = arith.constant 0 : i32
    %c0_i32_2 = arith.constant 0 : i32
    return %arg0, %arg1, %c0_i32, %c0_i32_0, %c0_i32_1 : i32, i32, i32, i32, i32
  }
  func.func @transform_1(%arg0: i32, %arg1: i32) -> (i32, i32, i32) {
    %c0_i32 = arith.constant 0 : i32
    %c0_i32_0 = arith.constant 0 : i32
    %c0_i32_1 = arith.constant 0 : i32
    %c0_i32_2 = arith.constant 0 : i32
    return %c0_i32, %c0_i32_0, %c0_i32_1 : i32, i32, i32
  }
  func.func @transform_2(%arg0: i32, %arg1: i32) -> (i32, i32) {
    %c0_i32 = arith.constant 0 : i32
    %c0_i32_0 = arith.constant 0 : i32
    %c0_i32_1 = arith.constant 0 : i32
    return %c0_i32, %c0_i32_0 : i32, i32
  }
  func.func @transform_3(%arg0: i32, %arg1: i32) -> (i32, i32, i32, i32) {
    %c0_i32 = arith.constant 0 : i32
    %c0_i32_0 = arith.constant 0 : i32
    %c0_i32_1 = arith.constant 0 : i32
    return %arg0, %arg1, %c0_i32, %c0_i32_0 : i32, i32, i32, i32
  }
}

</mosaic_0001>

<llo_original>
// kernel: tpu_custom_call.1
$region0: #{tpu_custom_call.1}
  #allocation0 [shape = 'u32[]', space=smem, size = 0x4, offset = 0x4, fixed_abs, tag = 'smem constant byte address 0x4 - core index']
  #allocation1 [shape = 'u32[72,128]{1,0:T(1,128)}', space=vmem, size = 0x9000, scoped, tag = 'internal scratch']
  %s0 = inlined_call_operand.vmem [shape: f32[2,2,10,18,8], index: 0, kind: input, shape index: {}]
  %s1 = inlined_call_operand.vmem [shape: f32[9,8,8], index: 1, kind: input, shape index: {}]
  %s2 = inlined_call_operand.vmem [shape: f32[1,8], index: 2, kind: input, shape index: {}]
  %s3 = inlined_call_operand.vmem [shape: f32[2,16,16,8], index: 3, kind: output, shape index: {}]
  %s4 = sld [smem:[#allocation0]]
  $region45: #{tpu_custom_call.1} parent=0
    _
  %s6 = ssub.s32 1, %s4
  %s7 = scalar_select 0, %s6, %s4
  loop: start=0, step=1, limit=6
  $region2: #{tpu_custom_call.1} parent=0 // loop_pre_header
    _
  $region3: #{tpu_custom_call.1} parent=0 // loop_header
    %s9 = sphi 0, %s13
    %p10 = scmp.ge.s32.totalorder %s9, 6
    %s16 = sphi 0, %s28
    %s17 = sphi 0, %s24
    %s18 = sphi 0, %s16
    %s19 = sphi 0, %s17
    %s20 = sphi 0, %s18
    %s21 = sphi 0, %s19
    %s33 = sphi 0, %s35
    %s36 = sphi 0, %s33
    %s37 = sphi 0, %s36
    %s53 = sphi 0, %s37
    %s57 = sphi 0, %s57
    %s59 = sphi 0, %s57
    %s60 = sphi 0, %s59
    %s74 = sphi 0, %s60
    %s78 = sphi 0, %s78
    %s80 = sphi 0, %s78
    %s81 = sphi 0, %s80
    %s95 = sphi 0, %s81
    %s103 = sphi 0, %s105
    %s106 = sphi 0, %s103
    %s107 = sphi 0, %s106
    %s123 = sphi 0, %s107
  $region4: #{tpu_custom_call.1} parent=0 // loop_header_branch
    %12 = sbr.rel (%p10) target = $region8
  $region5: #{tpu_custom_call.1} parent=0 // loop_body
    %s14 = ssub.s32 %s9, 1
    %s15 = ssub.s32 %s9, 2
    %s22 = sadd.s32 1, %s17
    %p23 = scmp.ge.s32.totalorder %s22, 2
    %s24 = scalar_select %p23, 0, %s22
    %s25 = sadd.s32 1, %s16
    %s26 = scalar_select %p23, %s25, %s16
    %p27 = scmp.ge.s32.totalorder %s26, 2
    %s28 = scalar_select %p27, 0, %s26
    %s29 = ssub.s32 %s16, %s28
    %s30 = ssub.s32 %s17, %s24
    %s31 = sor.u32 %s29, %s30
    %p32 = scmp.eq.s32.totalorder %s31, 0
    %s34 = sadd.s32 %s33, 1
    %s35 = scalar_select %p32, %s33, %s34
    %p38 = pneg %p32
    %p39 = scmp.eq.s32.totalorder %s9, 3
    %p40 = por %p38, %p39
    %p41 = scmp.ne.s32.totalorder %s33, %s36
    %p42 = scmp.eq.s32.totalorder %s9, 0
    %p43 = por %p41, %p42
    %p44 = scmp.ne.s32.totalorder %s33, %s36
    %p45 = scmp.eq.s32.totalorder %s14, 3
    %p46 = por %p44, %p45
    %p47 = scmp.ne.s32.totalorder %s36, %s37
    %p48 = scmp.eq.s32.totalorder %s14, 0
    %p49 = por %p47, %p48
    %p50 = scmp.ne.s32.totalorder %s36, %s37
    %p51 = scmp.eq.s32.totalorder %s15, 3
    %p52 = por %p50, %p51
    %p54 = scmp.ne.s32.totalorder %s37, %s53
    %p55 = scmp.eq.s32.totalorder %s15, 0
    %p56 = por %p54, %p55
    %s58 = sadd.s32 %s57, 1
    %p61 = scmp.eq.s32.totalorder %s9, 3
    %p62 = scmp.ne.s32.totalorder %s57, %s59
    %p63 = scmp.eq.s32.totalorder %s9, 0
    %p64 = por %p62, %p63
    %p65 = scmp.ne.s32.totalorder %s57, %s59
    %p66 = scmp.eq.s32.totalorder %s14, 3
    %p67 = por %p65, %p66
    %p68 = scmp.ne.s32.totalorder %s59, %s60
    %p69 = scmp.eq.s32.totalorder %s14, 0
    %p70 = por %p68, %p69
    %p71 = scmp.ne.s32.totalorder %s59, %s60
    %p72 = scmp.eq.s32.totalorder %s15, 3
    %p73 = por %p71, %p72
    %p75 = scmp.ne.s32.totalorder %s60, %s74
    %p76 = scmp.eq.s32.totalorder %s15, 0
    %p77 = por %p75, %p76
    %s79 = sadd.s32 %s78, 1
    %p82 = scmp.eq.s32.totalorder %s9, 3
    %p83 = scmp.ne.s32.totalorder %s78, %s80
    %p84 = scmp.eq.s32.totalorder %s9, 0
    %p85 = por %p83, %p84
    %p86 = scmp.ne.s32.totalorder %s78, %s80
    %p87 = scmp.eq.s32.totalorder %s14, 3
    %p88 = por %p86, %p87
    %p89 = scmp.ne.s32.totalorder %s80, %s81
    %p90 = scmp.eq.s32.totalorder %s14, 0
    %p91 = por %p89, %p90
    %p92 = scmp.ne.s32.totalorder %s80, %s81
    %p93 = scmp.eq.s32.totalorder %s15, 3
    %p94 = por %p92, %p93
    %p96 = scmp.ne.s32.totalorder %s81, %s95
    %p97 = scmp.eq.s32.totalorder %s15, 0
    %p98 = por %p96, %p97
    %s99 = ssub.s32 %s16, %s28
    %s100 = ssub.s32 %s17, %s24
    %s101 = sor.u32 %s99, %s100
    %p102 = scmp.eq.s32.totalorder %s101, 0
    %s104 = sadd.s32 %s103, 1
    %s105 = scalar_select %p102, %s103, %s104
    %p108 = pneg %p102
    %p109 = scmp.eq.s32.totalorder %s9, 3
    %p110 = por %p108, %p109
    %p111 = scmp.ne.s32.totalorder %s103, %s106
    %p112 = scmp.eq.s32.totalorder %s9, 0
    %p113 = por %p111, %p112
    %p114 = scmp.ne.s32.totalorder %s103, %s106
    %p115 = scmp.eq.s32.totalorder %s14, 3
    %p116 = por %p114, %p115
    %p117 = scmp.ne.s32.totalorder %s106, %s107
    %p118 = scmp.eq.s32.totalorder %s14, 0
    %p119 = por %p117, %p118
    %p120 = scmp.ne.s32.totalorder %s106, %s107
    %p121 = scmp.eq.s32.totalorder %s15, 3
    %p122 = por %p120, %p121
    %p124 = scmp.ne.s32.totalorder %s107, %s123
    %p125 = scmp.eq.s32.totalorder %s15, 0
    %p126 = por %p124, %p125
    %p127 = scmp.le.s32.totalorder 1, %s9
    %p128 = scmp.lt.s32.totalorder %s9, 5
    %p129 = pnand %p127, %p128
    %p130 = pneg %p129
    // Predicated region
    $region9: #{tpu_custom_call.1} parent=5 // pred_check
      _
    $region10: #{tpu_custom_call.1} parent=5 // pred_check_branch
      %132 = sbr.rel (%p129) target = $region12
    $region11: #{tpu_custom_call.1} parent=5 // pred_region
      %s133 = ssub.s32 %s9, 1
      // Predicated region
      $region13: #{tpu_custom_call.1} parent=11 // pred_check
        %p134 = pneg %p70
      $region14: #{tpu_custom_call.1} parent=11 // pred_check_branch
        %136 = sbr.rel (%p134) target = $region16
      $region15: #{tpu_custom_call.1} parent=11 // pred_region
        _
      $region16: #{tpu_custom_call.1} parent=11 // pred_fallthru
        _
      // Predicated region
      $region17: #{tpu_custom_call.1} parent=11 // pred_check
        %p137 = pneg %p91
      $region18: #{tpu_custom_call.1} parent=11 // pred_check_branch
        %139 = sbr.rel (%p137) target = $region20
      $region19: #{tpu_custom_call.1} parent=11 // pred_region
        _
      $region20: #{tpu_custom_call.1} parent=11 // pred_fallthru
        _
    $region12: #{tpu_custom_call.1} parent=5 // pred_fallthru
      _
    %p140 = scmp.lt.s32.totalorder %s9, 4
    // Predicated region
    $region21: #{tpu_custom_call.1} parent=5 // pred_check
      %p141 = pneg %p140
    $region22: #{tpu_custom_call.1} parent=5 // pred_check_branch
      %143 = sbr.rel (%p141) target = $region24
    $region23: #{tpu_custom_call.1} parent=5 // pred_region
      // Predicated region
      $region25: #{tpu_custom_call.1} parent=23 // pred_check
        %p144 = pneg %p43
      $region26: #{tpu_custom_call.1} parent=23 // pred_check_branch
        %146 = sbr.rel (%p144) target = $region28
      $region27: #{tpu_custom_call.1} parent=23 // pred_region
        %p147 = scmp.lt.s32.totalorder %s16, 1
        %s148 = scalar_select %p147, %s16, 1
        %p149 = scmp.lt.s32.totalorder %s17, 1
        %s150 = scalar_select %p149, %s17, 1
        %s151 = smul.addr %s150, 30
        %s152 = smul.addr %s148, 60
        %s153 = sadd.s32 %s151, %s152
        %s154 = smul.addr %s153, 8
        %s155 = scalar_lea.vmem %s0, %s154
      $region28: #{tpu_custom_call.1} parent=23 // pred_fallthru
        _
    $region24: #{tpu_custom_call.1} parent=5 // pred_fallthru
      _
    %p156 = scmp.le.s32.totalorder 1, %s9
    %p157 = scmp.lt.s32.totalorder %s9, 5
    %p158 = pnand %p156, %p157
    %p159 = pneg %p158
    // Predicated region
    $region29: #{tpu_custom_call.1} parent=5 // pred_check
      _
    $region30: #{tpu_custom_call.1} parent=5 // pred_check_branch
      %161 = sbr.rel (%p158) target = $region32
    $region31: #{tpu_custom_call.1} parent=5 // pred_region
      %s162 = ssub.s32 %s9, 1
      %p163 = scmp.lt.s32.totalorder %s18, 1
      %s164 = scalar_select %p163, %s18, 1
      %p165 = scmp.lt.s32.totalorder %s19, 1
      %s166 = scalar_select %p165, %s19, 1
      %s167 = smul.addr %s166, 30
      %s168 = smul.addr %s164, 60
      %s169 = sadd.s32 %s167, %s168
      %s170 = smul.addr %s169, 8
      %s171 = scalar_lea.vmem %s0, %s170
      %p172 = pneg %p49
      %p173 = pneg %p46
      %p174 = pneg %p70
      %p175 = pneg %p67
      %p176 = pneg %p91
      %p177 = pneg %p88
      %p178 = pneg %p119
      %p179 = pneg %p116
      %s180 = smul.u32 8, %s19
      %p181 = scmp.lt.s32.totalorder %s18, 1
      %s182 = scalar_select %p181, %s18, 1
      %p183 = scmp.lt.s32.totalorder %s180, 15
      %s184 = scalar_select %p183, %s180, 15
      %s185 = smul.addr %s184, 2
      %s186 = smul.addr %s182, 32
      %s187 = sadd.s32 %s185, %s186
      %s188 = smul.addr %s187, 8
      %s189 = scalar_lea.vmem %s3, %s188
      %p190 = scmp.lt.s32.totalorder %s18, 1
      %s191 = scalar_select %p190, %s18, 1
      %p192 = scmp.lt.s32.totalorder %s19, 1
      %s193 = scalar_select %p192, %s19, 1
      %s194 = smul.addr %s193, 30
      %s195 = smul.addr %s191, 60
      %s196 = sadd.s32 %s194, %s195
      %s197 = smul.addr %s196, 8
      %s198 = scalar_lea.vmem %s0, %s197
      %s199 = smul.u32 8, %s19
      %p200 = scmp.lt.s32.totalorder %s18, 1
      %s201 = scalar_select %p200, %s18, 1
      %p202 = scmp.lt.s32.totalorder %s199, 15
      %s203 = scalar_select %p202, %s199, 15
      %s204 = smul.addr %s203, 2
      %s205 = smul.addr %s201, 32
      %s206 = sadd.s32 %s204, %s205
      %s207 = smul.addr %s206, 8
      %s208 = scalar_lea.vmem %s3, %s207
      %s209 = smul.u32 8, %s19
      %v210 = vld [vmem:[%s198] sm:$0xff]
      %v211 = vld [vmem:[%s198 + $0x8] sm:$0xff]
      %v212 = vld [vmem:[%s198 + $0x18] sm:$0xff]
      %v213 = vld [vmem:[%s198 + $0x20] sm:$0xff]
      %v214 = vld [vmem:[%s198 + $0x30] sm:$0xff]
      %v215 = vld [vmem:[%s198 + $0x38] sm:$0xff]
      %v216 = vld [vmem:[%s198 + $0x48] sm:$0xff]
      %v217 = vld [vmem:[%s198 + $0x50] sm:$0xff]
      %v218 = vld [vmem:[%s198 + $0x60] sm:$0xff]
      %v219 = vld [vmem:[%s198 + $0x68] sm:$0xff]
      %v220 = vld [vmem:[%s198 + $0x78] sm:$0xff]
      %v221 = vld [vmem:[%s198 + $0x80] sm:$0xff]
      %v222 = vld [vmem:[%s198 + $0x90] sm:$0xff]
      %v223 = vld [vmem:[%s198 + $0x98] sm:$0xff]
      %v224 = vld [vmem:[%s198 + $0xa8] sm:$0xff]
      %v225 = vld [vmem:[%s198 + $0xb0] sm:$0xff]
      %v226 = vld [vmem:[%s1] sm:$0xff]
      %v227 = vld [vmem:[%s198 + $0x1] sm:$0xff]
      %v228 = vld [vmem:[%s198 + $0x9] sm:$0xff]
      %v229 = vld [vmem:[%s198 + $0x19] sm:$0xff]
      %v230 = vld [vmem:[%s198 + $0x21] sm:$0xff]
      %v231 = vld [vmem:[%s198 + $0x31] sm:$0xff]
      %v232 = vld [vmem:[%s198 + $0x39] sm:$0xff]
      %v233 = vld [vmem:[%s198 + $0x49] sm:$0xff]
      %v234 = vld [vmem:[%s198 + $0x51] sm:$0xff]
      %v235 = vld [vmem:[%s198 + $0x61] sm:$0xff]
      %v236 = vld [vmem:[%s198 + $0x69] sm:$0xff]
      %v237 = vld [vmem:[%s198 + $0x79] sm:$0xff]
      %v238 = vld [vmem:[%s198 + $0x81] sm:$0xff]
      %v239 = vld [vmem:[%s198 + $0x91] sm:$0xff]
      %v240 = vld [vmem:[%s198 + $0x99] sm:$0xff]
      %v241 = vld [vmem:[%s198 + $0xa9] sm:$0xff]
      %v242 = vld [vmem:[%s198 + $0xb1] sm:$0xff]
      %s243 = scalar_lea.vmem %s1, 8
      %v244 = vld [vmem:[%s243] sm:$0xff]
      %vm245 = vcmask 64512
      %v247 = vsel %vm245, %v227, 0
      %v250 = vsel %vm245, %v228, 0
      %v253 = vsel %vm245, %v229, 0
      %v256 = vsel %vm245, %v230, 0
      %v259 = vsel %vm245, %v231, 0
      %v262 = vsel %vm245, %v232, 0
      %v265 = vsel %vm245, %v233, 0
      %v268 = vsel %vm245, %v234, 0
      %v271 = vsel %vm245, %v235, 0
      %v274 = vsel %vm245, %v236, 0
      %v277 = vsel %vm245, %v237, 0
      %v280 = vsel %vm245, %v238, 0
      %v283 = vsel %vm245, %v239, 0
      %v286 = vsel %vm245, %v240, 0
      %v289 = vsel %vm245, %v241, 0
      %v292 = vsel %vm245, %v242, 0
      %294 = vmatpush.msra.mxu0 0.0
      %295 = vmatpush.msra.mxu0 0.0
      %296 = vmatpush.msra.mxu0 0.0
      %297 = vmatpush.msra.mxu0 0.0
      %298 = vmatpush.msra.mxu0 0.0
      %299 = vmatpush.msra.mxu0 0.0
      %300 = vmatpush.msra.mxu0 0.0
      %301 = vmatpush.msra.mxu0 0.0
      %302 = vmatpush.msra.mxu0 0.0
      %303 = vmatpush.msra.mxu0 0.0
      %304 = vmatpush.msra.mxu0 0.0
      %305 = vmatpush.msra.mxu0 0.0
      %306 = vmatpush.msra.mxu0 0.0
      %307 = vmatpush.msra.mxu0 0.0
      %308 = vmatpush.msra.mxu0 0.0
      %309 = vmatpush.msra.mxu0 %v244
      %310 = vmatmul.f32.gmra.mxu0 %v247
      %v311 = vpop.f32.mrf.mxu0
      %v312 = vadd.f32 0.0, %v311
      %313 = vmatmul.f32.gmra.mxu0 %v250
      %v314 = vpop.f32.mrf.mxu0
      %v315 = vadd.f32 0.0, %v314
      %316 = vmatmul.f32.gmra.mxu0 %v253
      %v317 = vpop.f32.mrf.mxu0
      %v318 = vadd.f32 0.0, %v317
      %319 = vmatmul.f32.gmra.mxu0 %v256
      %v320 = vpop.f32.mrf.mxu0
      %v321 = vadd.f32 0.0, %v320
      %322 = vmatmul.f32.gmra.mxu0 %v259
      %v323 = vpop.f32.mrf.mxu0
      %v324 = vadd.f32 0.0, %v323
      %325 = vmatmul.f32.gmra.mxu0 %v262
      %v326 = vpop.f32.mrf.mxu0
      %v327 = vadd.f32 0.0, %v326
      %328 = vmatmul.f32.gmra.mxu0 %v265
      %v329 = vpop.f32.mrf.mxu0
      %v330 = vadd.f32 0.0, %v329
      %331 = vmatmul.f32.gmra.mxu0 %v268
      %v332 = vpop.f32.mrf.mxu0
      %v333 = vadd.f32 0.0, %v332
      %334 = vmatmul.f32.gmra.mxu0 %v271
      %v335 = vpop.f32.mrf.mxu0
      %v336 = vadd.f32 0.0, %v335
      %337 = vmatmul.f32.gmra.mxu0 %v274
      %v338 = vpop.f32.mrf.mxu0
      %v339 = vadd.f32 0.0, %v338
      %340 = vmatmul.f32.gmra.mxu0 %v277
      %v341 = vpop.f32.mrf.mxu0
      %v342 = vadd.f32 0.0, %v341
      %343 = vmatmul.f32.gmra.mxu0 %v280
      %v344 = vpop.f32.mrf.mxu0
      %v345 = vadd.f32 0.0, %v344
      %346 = vmatmul.f32.gmra.mxu0 %v283
      %v347 = vpop.f32.mrf.mxu0
      %v348 = vadd.f32 0.0, %v347
      %349 = vmatmul.f32.gmra.mxu0 %v286
      %v350 = vpop.f32.mrf.mxu0
      %v351 = vadd.f32 0.0, %v350
      %352 = vmatmul.f32.gmra.mxu0 %v289
      %v353 = vpop.f32.mrf.mxu0
      %v354 = vadd.f32 0.0, %v353
      %355 = vmatmul.f32.gmra.mxu0 %v292
      %v356 = vpop.f32.mrf.mxu0
      %v357 = vadd.f32 0.0, %v356
      %358 = vdwg.mxu0
      %v360 = vsel %vm245, %v210, 0
      %v363 = vsel %vm245, %v211, 0
      %v366 = vsel %vm245, %v212, 0
      %v369 = vsel %vm245, %v213, 0
      %v372 = vsel %vm245, %v214, 0
      %v375 = vsel %vm245, %v215, 0
      %v378 = vsel %vm245, %v216, 0
      %v381 = vsel %vm245, %v217, 0
      %v384 = vsel %vm245, %v218, 0
      %v387 = vsel %vm245, %v219, 0
      %v390 = vsel %vm245, %v220, 0
      %v393 = vsel %vm245, %v221, 0
      %v396 = vsel %vm245, %v222, 0
      %v399 = vsel %vm245, %v223, 0
      %v402 = vsel %vm245, %v224, 0
      %v405 = vsel %vm245, %v225, 0
      %407 = vmatpush.msra.mxu0 0.0
      %408 = vmatpush.msra.mxu0 0.0
      %409 = vmatpush.msra.mxu0 0.0
      %410 = vmatpush.msra.mxu0 0.0
      %411 = vmatpush.msra.mxu0 0.0
      %412 = vmatpush.msra.mxu0 0.0
      %413 = vmatpush.msra.mxu0 0.0
      %414 = vmatpush.msra.mxu0 0.0
      %415 = vmatpush.msra.mxu0 0.0
      %416 = vmatpush.msra.mxu0 0.0
      %417 = vmatpush.msra.mxu0 0.0
      %418 = vmatpush.msra.mxu0 0.0
      %419 = vmatpush.msra.mxu0 0.0
      %420 = vmatpush.msra.mxu0 0.0
      %421 = vmatpush.msra.mxu0 0.0
      %422 = vmatpush.msra.mxu0 %v226
      %423 = vmatmul.f32.gmra.mxu0 %v360
      %v424 = vpop.f32.mrf.mxu0
      %v425 = vadd.f32 %v312, %v424
      %426 = vmatmul.f32.gmra.mxu0 %v363
      %v427 = vpop.f32.mrf.mxu0
      %v428 = vadd.f32 %v315, %v427
      %429 = vmatmul.f32.gmra.mxu0 %v366
      %v430 = vpop.f32.mrf.mxu0
      %v431 = vadd.f32 %v318, %v430
      %432 = vmatmul.f32.gmra.mxu0 %v369
      %v433 = vpop.f32.mrf.mxu0
      %v434 = vadd.f32 %v321, %v433
      %435 = vmatmul.f32.gmra.mxu0 %v372
      %v436 = vpop.f32.mrf.mxu0
      %v437 = vadd.f32 %v324, %v436
      %438 = vmatmul.f32.gmra.mxu0 %v375
      %v439 = vpop.f32.mrf.mxu0
      %v440 = vadd.f32 %v327, %v439
      %441 = vmatmul.f32.gmra.mxu0 %v378
      %v442 = vpop.f32.mrf.mxu0
      %v443 = vadd.f32 %v330, %v442
      %444 = vmatmul.f32.gmra.mxu0 %v381
      %v445 = vpop.f32.mrf.mxu0
      %v446 = vadd.f32 %v333, %v445
      %447 = vmatmul.f32.gmra.mxu0 %v384
      %v448 = vpop.f32.mrf.mxu0
      %v449 = vadd.f32 %v336, %v448
      %450 = vmatmul.f32.gmra.mxu0 %v387
      %v451 = vpop.f32.mrf.mxu0
      %v452 = vadd.f32 %v339, %v451
      %453 = vmatmul.f32.gmra.mxu0 %v390
      %v454 = vpop.f32.mrf.mxu0
      %v455 = vadd.f32 %v342, %v454
      %456 = vmatmul.f32.gmra.mxu0 %v393
      %v457 = vpop.f32.mrf.mxu0
      %v458 = vadd.f32 %v345, %v457
      %459 = vmatmul.f32.gmra.mxu0 %v396
      %v460 = vpop.f32.mrf.mxu0
      %v461 = vadd.f32 %v348, %v460
      %462 = vmatmul.f32.gmra.mxu0 %v399
      %v463 = vpop.f32.mrf.mxu0
      %v464 = vadd.f32 %v351, %v463
      %465 = vmatmul.f32.gmra.mxu0 %v402
      %v466 = vpop.f32.mrf.mxu0
      %v467 = vadd.f32 %v354, %v466
      %468 = vmatmul.f32.gmra.mxu0 %v405
      %v469 = vpop.f32.mrf.mxu0
      %v470 = vadd.f32 %v357, %v469
      %471 = vdwg.mxu0
      %v472 = vld [vmem:[%s198 + $0x2] sm:$0xff]
      %v473 = vld [vmem:[%s198 + $0xa] sm:$0xff]
      %v474 = vld [vmem:[%s198 + $0x1a] sm:$0xff]
      %v475 = vld [vmem:[%s198 + $0x22] sm:$0xff]
      %v476 = vld [vmem:[%s198 + $0x32] sm:$0xff]
      %v477 = vld [vmem:[%s198 + $0x3a] sm:$0xff]
      %v478 = vld [vmem:[%s198 + $0x4a] sm:$0xff]
      %v479 = vld [vmem:[%s198 + $0x52] sm:$0xff]
      %v480 = vld [vmem:[%s198 + $0x62] sm:$0xff]
      %v481 = vld [vmem:[%s198 + $0x6a] sm:$0xff]
      %v482 = vld [vmem:[%s198 + $0x7a] sm:$0xff]
      %v483 = vld [vmem:[%s198 + $0x82] sm:$0xff]
      %v484 = vld [vmem:[%s198 + $0x92] sm:$0xff]
      %v485 = vld [vmem:[%s198 + $0x9a] sm:$0xff]
      %v486 = vld [vmem:[%s198 + $0xaa] sm:$0xff]
      %v487 = vld [vmem:[%s198 + $0xb2] sm:$0xff]
      %s488 = scalar_lea.vmem %s1, 16
      %v489 = vld [vmem:[%s488] sm:$0xff]
      %v491 = vsel %vm245, %v472, 0
      %v494 = vsel %vm245, %v473, 0
      %v497 = vsel %vm245, %v474, 0
      %v500 = vsel %vm245, %v475, 0
      %v503 = vsel %vm245, %v476, 0
      %v506 = vsel %vm245, %v477, 0
      %v509 = vsel %vm245, %v478, 0
      %v512 = vsel %vm245, %v479, 0
      %v515 = vsel %vm245, %v480, 0
      %v518 = vsel %vm245, %v481, 0
      %v521 = vsel %vm245, %v482, 0
      %v524 = vsel %vm245, %v483, 0
      %v527 = vsel %vm245, %v484, 0
      %v530 = vsel %vm245, %v485, 0
      %v533 = vsel %vm245, %v486, 0
      %v536 = vsel %vm245, %v487, 0
      %538 = vmatpush.msra.mxu0 0.0
      %539 = vmatpush.msra.mxu0 0.0
      %540 = vmatpush.msra.mxu0 0.0
      %541 = vmatpush.msra.mxu0 0.0
      %542 = vmatpush.msra.mxu0 0.0
      %543 = vmatpush.msra.mxu0 0.0
      %544 = vmatpush.msra.mxu0 0.0
      %545 = vmatpush.msra.mxu0 0.0
      %546 = vmatpush.msra.mxu0 0.0
      %547 = vmatpush.msra.mxu0 0.0
      %548 = vmatpush.msra.mxu0 0.0
      %549 = vmatpush.msra.mxu0 0.0
      %550 = vmatpush.msra.mxu0 0.0
      %551 = vmatpush.msra.mxu0 0.0
      %552 = vmatpush.msra.mxu0 0.0
      %553 = vmatpush.msra.mxu0 %v489
      %554 = vmatmul.f32.gmra.mxu0 %v491
      %v555 = vpop.f32.mrf.mxu0
      %v556 = vadd.f32 0.0, %v555
      %557 = vmatmul.f32.gmra.mxu0 %v494
      %v558 = vpop.f32.mrf.mxu0
      %v559 = vadd.f32 0.0, %v558
      %560 = vmatmul.f32.gmra.mxu0 %v497
      %v561 = vpop.f32.mrf.mxu0
      %v562 = vadd.f32 0.0, %v561
      %563 = vmatmul.f32.gmra.mxu0 %v500
      %v564 = vpop.f32.mrf.mxu0
      %v565 = vadd.f32 0.0, %v564
      %566 = vmatmul.f32.gmra.mxu0 %v503
      %v567 = vpop.f32.mrf.mxu0
      %v568 = vadd.f32 0.0, %v567
      %569 = vmatmul.f32.gmra.mxu0 %v506
      %v570 = vpop.f32.mrf.mxu0
      %v571 = vadd.f32 0.0, %v570
      %572 = vmatmul.f32.gmra.mxu0 %v509
      %v573 = vpop.f32.mrf.mxu0
      %v574 = vadd.f32 0.0, %v573
      %575 = vmatmul.f32.gmra.mxu0 %v512
      %v576 = vpop.f32.mrf.mxu0
      %v577 = vadd.f32 0.0, %v576
      %578 = vmatmul.f32.gmra.mxu0 %v515
      %v579 = vpop.f32.mrf.mxu0
      %v580 = vadd.f32 0.0, %v579
      %581 = vmatmul.f32.gmra.mxu0 %v518
      %v582 = vpop.f32.mrf.mxu0
      %v583 = vadd.f32 0.0, %v582
      %584 = vmatmul.f32.gmra.mxu0 %v521
      %v585 = vpop.f32.mrf.mxu0
      %v586 = vadd.f32 0.0, %v585
      %587 = vmatmul.f32.gmra.mxu0 %v524
      %v588 = vpop.f32.mrf.mxu0
      %v589 = vadd.f32 0.0, %v588
      %590 = vmatmul.f32.gmra.mxu0 %v527
      %v591 = vpop.f32.mrf.mxu0
      %v592 = vadd.f32 0.0, %v591
      %593 = vmatmul.f32.gmra.mxu0 %v530
      %v594 = vpop.f32.mrf.mxu0
      %v595 = vadd.f32 0.0, %v594
      %596 = vmatmul.f32.gmra.mxu0 %v533
      %v597 = vpop.f32.mrf.mxu0
      %v598 = vadd.f32 0.0, %v597
      %599 = vmatmul.f32.gmra.mxu0 %v536
      %v600 = vpop.f32.mrf.mxu0
      %v601 = vadd.f32 0.0, %v600
      %602 = vdwg.mxu0
      %v603 = vadd.f32 %v425, %v556
      %v604 = vadd.f32 %v428, %v559
      %v605 = vadd.f32 %v431, %v562
      %v606 = vadd.f32 %v434, %v565
      %v607 = vadd.f32 %v437, %v568
      %v608 = vadd.f32 %v440, %v571
      %v609 = vadd.f32 %v443, %v574
      %v610 = vadd.f32 %v446, %v577
      %v611 = vadd.f32 %v449, %v580
      %v612 = vadd.f32 %v452, %v583
      %v613 = vadd.f32 %v455, %v586
      %v614 = vadd.f32 %v458, %v589
      %v615 = vadd.f32 %v461, %v592
      %v616 = vadd.f32 %v464, %v595
      %v617 = vadd.f32 %v467, %v598
      %v618 = vadd.f32 %v470, %v601
      %s619 = scalar_lea.vmem %s198, 24
      %v620 = vld [vmem:[%s619] sm:$0xff]
      %v621 = vld [vmem:[%s619 + $0x8] sm:$0xff]
      %v622 = vld [vmem:[%s619 + $0x18] sm:$0xff]
      %v623 = vld [vmem:[%s619 + $0x20] sm:$0xff]
      %v624 = vld [vmem:[%s619 + $0x30] sm:$0xff]
      %v625 = vld [vmem:[%s619 + $0x38] sm:$0xff]
      %v626 = vld [vmem:[%s619 + $0x48] sm:$0xff]
      %v627 = vld [vmem:[%s619 + $0x50] sm:$0xff]
      %v628 = vld [vmem:[%s619 + $0x60] sm:$0xff]
      %v629 = vld [vmem:[%s619 + $0x68] sm:$0xff]
      %v630 = vld [vmem:[%s619 + $0x78] sm:$0xff]
      %v631 = vld [vmem:[%s619 + $0x80] sm:$0xff]
      %v632 = vld [vmem:[%s619 + $0x90] sm:$0xff]
      %v633 = vld [vmem:[%s619 + $0x98] sm:$0xff]
      %v634 = vld [vmem:[%s619 + $0xa8] sm:$0xff]
      %v635 = vld [vmem:[%s619 + $0xb0] sm:$0xff]
      %s636 = scalar_lea.vmem %s1, 24
      %v637 = vld [vmem:[%s636] sm:$0xff]
      %v639 = vsel %vm245, %v620, 0
      %v642 = vsel %vm245, %v621, 0
      %v645 = vsel %vm245, %v622, 0
      %v648 = vsel %vm245, %v623, 0
      %v651 = vsel %vm245, %v624, 0
      %v654 = vsel %vm245, %v625, 0
      %v657 = vsel %vm245, %v626, 0
      %v660 = vsel %vm245, %v627, 0
      %v663 = vsel %vm245, %v628, 0
      %v666 = vsel %vm245, %v629, 0
      %v669 = vsel %vm245, %v630, 0
      %v672 = vsel %vm245, %v631, 0
      %v675 = vsel %vm245, %v632, 0
      %v678 = vsel %vm245, %v633, 0
      %v681 = vsel %vm245, %v634, 0
      %v684 = vsel %vm245, %v635, 0
      %686 = vmatpush.msra.mxu0 0.0
      %687 = vmatpush.msra.mxu0 0.0
      %688 = vmatpush.msra.mxu0 0.0
      %689 = vmatpush.msra.mxu0 0.0
      %690 = vmatpush.msra.mxu0 0.0
      %691 = vmatpush.msra.mxu0 0.0
      %692 = vmatpush.msra.mxu0 0.0
      %693 = vmatpush.msra.mxu0 0.0
      %694 = vmatpush.msra.mxu0 0.0
      %695 = vmatpush.msra.mxu0 0.0
      %696 = vmatpush.msra.mxu0 0.0
      %697 = vmatpush.msra.mxu0 0.0
      %698 = vmatpush.msra.mxu0 0.0
      %699 = vmatpush.msra.mxu0 0.0
      %700 = vmatpush.msra.mxu0 0.0
      %701 = vmatpush.msra.mxu0 %v637
      %702 = vmatmul.f32.gmra.mxu0 %v639
      %v703 = vpop.f32.mrf.mxu0
      %v704 = vadd.f32 0.0, %v703
      %705 = vmatmul.f32.gmra.mxu0 %v642
      %v706 = vpop.f32.mrf.mxu0
      %v707 = vadd.f32 0.0, %v706
      %708 = vmatmul.f32.gmra.mxu0 %v645
      %v709 = vpop.f32.mrf.mxu0
      %v710 = vadd.f32 0.0, %v709
      %711 = vmatmul.f32.gmra.mxu0 %v648
      %v712 = vpop.f32.mrf.mxu0
      %v713 = vadd.f32 0.0, %v712
      %714 = vmatmul.f32.gmra.mxu0 %v651
      %v715 = vpop.f32.mrf.mxu0
      %v716 = vadd.f32 0.0, %v715
      %717 = vmatmul.f32.gmra.mxu0 %v654
      %v718 = vpop.f32.mrf.mxu0
      %v719 = vadd.f32 0.0, %v718
      %720 = vmatmul.f32.gmra.mxu0 %v657
      %v721 = vpop.f32.mrf.mxu0
      %v722 = vadd.f32 0.0, %v721
      %723 = vmatmul.f32.gmra.mxu0 %v660
      %v724 = vpop.f32.mrf.mxu0
      %v725 = vadd.f32 0.0, %v724
      %726 = vmatmul.f32.gmra.mxu0 %v663
      %v727 = vpop.f32.mrf.mxu0
      %v728 = vadd.f32 0.0, %v727
      %729 = vmatmul.f32.gmra.mxu0 %v666
      %v730 = vpop.f32.mrf.mxu0
      %v731 = vadd.f32 0.0, %v730
      %732 = vmatmul.f32.gmra.mxu0 %v669
      %v733 = vpop.f32.mrf.mxu0
      %v734 = vadd.f32 0.0, %v733
      %735 = vmatmul.f32.gmra.mxu0 %v672
      %v736 = vpop.f32.mrf.mxu0
      %v737 = vadd.f32 0.0, %v736
      %738 = vmatmul.f32.gmra.mxu0 %v675
      %v739 = vpop.f32.mrf.mxu0
      %v740 = vadd.f32 0.0, %v739
      %741 = vmatmul.f32.gmra.mxu0 %v678
      %v742 = vpop.f32.mrf.mxu0
      %v743 = vadd.f32 0.0, %v742
      %744 = vmatmul.f32.gmra.mxu0 %v681
      %v745 = vpop.f32.mrf.mxu0
      %v746 = vadd.f32 0.0, %v745
      %747 = vmatmul.f32.gmra.mxu0 %v684
      %v748 = vpop.f32.mrf.mxu0
      %v749 = vadd.f32 0.0, %v748
      %750 = vdwg.mxu0
      %v751 = vadd.f32 %v603, %v704
      %v752 = vadd.f32 %v604, %v707
      %v753 = vadd.f32 %v605, %v710
      %v754 = vadd.f32 %v606, %v713
      %v755 = vadd.f32 %v607, %v716
      %v756 = vadd.f32 %v608, %v719
      %v757 = vadd.f32 %v609, %v722
      %v758 = vadd.f32 %v610, %v725
      %v759 = vadd.f32 %v611, %v728
      %v760 = vadd.f32 %v612, %v731
      %v761 = vadd.f32 %v613, %v734
      %v762 = vadd.f32 %v614, %v737
      %v763 = vadd.f32 %v615, %v740
      %v764 = vadd.f32 %v616, %v743
      %v765 = vadd.f32 %v617, %v746
      %v766 = vadd.f32 %v618, %v749
      %v767 = vld [vmem:[%s619 + $0x1] sm:$0xff]
      %v768 = vld [vmem:[%s619 + $0x9] sm:$0xff]
      %v769 = vld [vmem:[%s619 + $0x19] sm:$0xff]
      %v770 = vld [vmem:[%s619 + $0x21] sm:$0xff]
      %v771 = vld [vmem:[%s619 + $0x31] sm:$0xff]
      %v772 = vld [vmem:[%s619 + $0x39] sm:$0xff]
      %v773 = vld [vmem:[%s619 + $0x49] sm:$0xff]
      %v774 = vld [vmem:[%s619 + $0x51] sm:$0xff]
      %v775 = vld [vmem:[%s619 + $0x61] sm:$0xff]
      %v776 = vld [vmem:[%s619 + $0x69] sm:$0xff]
      %v777 = vld [vmem:[%s619 + $0x79] sm:$0xff]
      %v778 = vld [vmem:[%s619 + $0x81] sm:$0xff]
      %v779 = vld [vmem:[%s619 + $0x91] sm:$0xff]
      %v780 = vld [vmem:[%s619 + $0x99] sm:$0xff]
      %v781 = vld [vmem:[%s619 + $0xa9] sm:$0xff]
      %v782 = vld [vmem:[%s619 + $0xb1] sm:$0xff]
      %s783 = scalar_lea.vmem %s1, 32
      %v784 = vld [vmem:[%s783] sm:$0xff]
      %v786 = vsel %vm245, %v767, 0
      %v789 = vsel %vm245, %v768, 0
      %v792 = vsel %vm245, %v769, 0
      %v795 = vsel %vm245, %v770, 0
      %v798 = vsel %vm245, %v771, 0
      %v801 = vsel %vm245, %v772, 0
      %v804 = vsel %vm245, %v773, 0
      %v807 = vsel %vm245, %v774, 0
      %v810 = vsel %vm245, %v775, 0
      %v813 = vsel %vm245, %v776, 0
      %v816 = vsel %vm245, %v777, 0
      %v819 = vsel %vm245, %v778, 0
      %v822 = vsel %vm245, %v779, 0
      %v825 = vsel %vm245, %v780, 0
      %v828 = vsel %vm245, %v781, 0
      %v831 = vsel %vm245, %v782, 0
      %833 = vmatpush.msra.mxu0 0.0
      %834 = vmatpush.msra.mxu0 0.0
      %835 = vmatpush.msra.mxu0 0.0
      %836 = vmatpush.msra.mxu0 0.0
      %837 = vmatpush.msra.mxu0 0.0
      %838 = vmatpush.msra.mxu0 0.0
      %839 = vmatpush.msra.mxu0 0.0
      %840 = vmatpush.msra.mxu0 0.0
      %841 = vmatpush.msra.mxu0 0.0
      %842 = vmatpush.msra.mxu0 0.0
      %843 = vmatpush.msra.mxu0 0.0
      %844 = vmatpush.msra.mxu0 0.0
      %845 = vmatpush.msra.mxu0 0.0
      %846 = vmatpush.msra.mxu0 0.0
      %847 = vmatpush.msra.mxu0 0.0
      %848 = vmatpush.msra.mxu0 %v784
      %849 = vmatmul.f32.gmra.mxu0 %v786
      %v850 = vpop.f32.mrf.mxu0
      %v851 = vadd.f32 0.0, %v850
      %852 = vmatmul.f32.gmra.mxu0 %v789
      %v853 = vpop.f32.mrf.mxu0
      %v854 = vadd.f32 0.0, %v853
      %855 = vmatmul.f32.gmra.mxu0 %v792
      %v856 = vpop.f32.mrf.mxu0
      %v857 = vadd.f32 0.0, %v856
      %858 = vmatmul.f32.gmra.mxu0 %v795
      %v859 = vpop.f32.mrf.mxu0
      %v860 = vadd.f32 0.0, %v859
      %861 = vmatmul.f32.gmra.mxu0 %v798
      %v862 = vpop.f32.mrf.mxu0
      %v863 = vadd.f32 0.0, %v862
      %864 = vmatmul.f32.gmra.mxu0 %v801
      %v865 = vpop.f32.mrf.mxu0
      %v866 = vadd.f32 0.0, %v865
      %867 = vmatmul.f32.gmra.mxu0 %v804
      %v868 = vpop.f32.mrf.mxu0
      %v869 = vadd.f32 0.0, %v868
      %870 = vmatmul.f32.gmra.mxu0 %v807
      %v871 = vpop.f32.mrf.mxu0
      %v872 = vadd.f32 0.0, %v871
      %873 = vmatmul.f32.gmra.mxu0 %v810
      %v874 = vpop.f32.mrf.mxu0
      %v875 = vadd.f32 0.0, %v874
      %876 = vmatmul.f32.gmra.mxu0 %v813
      %v877 = vpop.f32.mrf.mxu0
      %v878 = vadd.f32 0.0, %v877
      %879 = vmatmul.f32.gmra.mxu0 %v816
      %v880 = vpop.f32.mrf.mxu0
      %v881 = vadd.f32 0.0, %v880
      %882 = vmatmul.f32.gmra.mxu0 %v819
      %v883 = vpop.f32.mrf.mxu0
      %v884 = vadd.f32 0.0, %v883
      %885 = vmatmul.f32.gmra.mxu0 %v822
      %v886 = vpop.f32.mrf.mxu0
      %v887 = vadd.f32 0.0, %v886
      %888 = vmatmul.f32.gmra.mxu0 %v825
      %v889 = vpop.f32.mrf.mxu0
      %v890 = vadd.f32 0.0, %v889
      %891 = vmatmul.f32.gmra.mxu0 %v828
      %v892 = vpop.f32.mrf.mxu0
      %v893 = vadd.f32 0.0, %v892
      %894 = vmatmul.f32.gmra.mxu0 %v831
      %v895 = vpop.f32.mrf.mxu0
      %v896 = vadd.f32 0.0, %v895
      %897 = vdwg.mxu0
      %v898 = vadd.f32 %v751, %v851
      %v899 = vadd.f32 %v752, %v854
      %v900 = vadd.f32 %v753, %v857
      %v901 = vadd.f32 %v754, %v860
      %v902 = vadd.f32 %v755, %v863
      %v903 = vadd.f32 %v756, %v866
      %v904 = vadd.f32 %v757, %v869
      %v905 = vadd.f32 %v758, %v872
      %v906 = vadd.f32 %v759, %v875
      %v907 = vadd.f32 %v760, %v878
      %v908 = vadd.f32 %v761, %v881
      %v909 = vadd.f32 %v762, %v884
      %v910 = vadd.f32 %v763, %v887
      %v911 = vadd.f32 %v764, %v890
      %v912 = vadd.f32 %v765, %v893
      %v913 = vadd.f32 %v766, %v896
      %v914 = vld [vmem:[%s619 + $0x2] sm:$0xff]
      %v915 = vld [vmem:[%s619 + $0xa] sm:$0xff]
      %v916 = vld [vmem:[%s619 + $0x1a] sm:$0xff]
      %v917 = vld [vmem:[%s619 + $0x22] sm:$0xff]
      %v918 = vld [vmem:[%s619 + $0x32] sm:$0xff]
      %v919 = vld [vmem:[%s619 + $0x3a] sm:$0xff]
      %v920 = vld [vmem:[%s619 + $0x4a] sm:$0xff]
      %v921 = vld [vmem:[%s619 + $0x52] sm:$0xff]
      %v922 = vld [vmem:[%s619 + $0x62] sm:$0xff]
      %v923 = vld [vmem:[%s619 + $0x6a] sm:$0xff]
      %v924 = vld [vmem:[%s619 + $0x7a] sm:$0xff]
      %v925 = vld [vmem:[%s619 + $0x82] sm:$0xff]
      %v926 = vld [vmem:[%s619 + $0x92] sm:$0xff]
      %v927 = vld [vmem:[%s619 + $0x9a] sm:$0xff]
      %v928 = vld [vmem:[%s619 + $0xaa] sm:$0xff]
      %v929 = vld [vmem:[%s619 + $0xb2] sm:$0xff]
      %s930 = scalar_lea.vmem %s1, 40
      %v931 = vld [vmem:[%s930] sm:$0xff]
      %v933 = vsel %vm245, %v914, 0
      %v936 = vsel %vm245, %v915, 0
      %v939 = vsel %vm245, %v916, 0
      %v942 = vsel %vm245, %v917, 0
      %v945 = vsel %vm245, %v918, 0
      %v948 = vsel %vm245, %v919, 0
      %v951 = vsel %vm245, %v920, 0
      %v954 = vsel %vm245, %v921, 0
      %v957 = vsel %vm245, %v922, 0
      %v960 = vsel %vm245, %v923, 0
      %v963 = vsel %vm245, %v924, 0
      %v966 = vsel %vm245, %v925, 0
      %v969 = vsel %vm245, %v926, 0
      %v972 = vsel %vm245, %v927, 0
      %v975 = vsel %vm245, %v928, 0
      %v978 = vsel %vm245, %v929, 0
      %980 = vmatpush.msra.mxu0 0.0
      %981 = vmatpush.msra.mxu0 0.0
      %982 = vmatpush.msra.mxu0 0.0
      %983 = vmatpush.msra.mxu0 0.0
      %984 = vmatpush.msra.mxu0 0.0
      %985 = vmatpush.msra.mxu0 0.0
      %986 = vmatpush.msra.mxu0 0.0
      %987 = vmatpush.msra.mxu0 0.0
      %988 = vmatpush.msra.mxu0 0.0
      %989 = vmatpush.msra.mxu0 0.0
      %990 = vmatpush.msra.mxu0 0.0
      %991 = vmatpush.msra.mxu0 0.0
      %992 = vmatpush.msra.mxu0 0.0
      %993 = vmatpush.msra.mxu0 0.0
      %994 = vmatpush.msra.mxu0 0.0
      %995 = vmatpush.msra.mxu0 %v931
      %996 = vmatmul.f32.gmra.mxu0 %v933
      %v997 = vpop.f32.mrf.mxu0
      %v998 = vadd.f32 0.0, %v997
      %999 = vmatmul.f32.gmra.mxu0 %v936
      %v1000 = vpop.f32.mrf.mxu0
      %v1001 = vadd.f32 0.0, %v1000
      %1002 = vmatmul.f32.gmra.mxu0 %v939
      %v1003 = vpop.f32.mrf.mxu0
      %v1004 = vadd.f32 0.0, %v1003
      %1005 = vmatmul.f32.gmra.mxu0 %v942
      %v1006 = vpop.f32.mrf.mxu0
      %v1007 = vadd.f32 0.0, %v1006
      %1008 = vmatmul.f32.gmra.mxu0 %v945
      %v1009 = vpop.f32.mrf.mxu0
      %v1010 = vadd.f32 0.0, %v1009
      %1011 = vmatmul.f32.gmra.mxu0 %v948
      %v1012 = vpop.f32.mrf.mxu0
      %v1013 = vadd.f32 0.0, %v1012
      %1014 = vmatmul.f32.gmra.mxu0 %v951
      %v1015 = vpop.f32.mrf.mxu0
      %v1016 = vadd.f32 0.0, %v1015
      %1017 = vmatmul.f32.gmra.mxu0 %v954
      %v1018 = vpop.f32.mrf.mxu0
      %v1019 = vadd.f32 0.0, %v1018
      %1020 = vmatmul.f32.gmra.mxu0 %v957
      %v1021 = vpop.f32.mrf.mxu0
      %v1022 = vadd.f32 0.0, %v1021
      %1023 = vmatmul.f32.gmra.mxu0 %v960
      %v1024 = vpop.f32.mrf.mxu0
      %v1025 = vadd.f32 0.0, %v1024
      %1026 = vmatmul.f32.gmra.mxu0 %v963
      %v1027 = vpop.f32.mrf.mxu0
      %v1028 = vadd.f32 0.0, %v1027
      %1029 = vmatmul.f32.gmra.mxu0 %v966
      %v1030 = vpop.f32.mrf.mxu0
      %v1031 = vadd.f32 0.0, %v1030
      %1032 = vmatmul.f32.gmra.mxu0 %v969
      %v1033 = vpop.f32.mrf.mxu0
      %v1034 = vadd.f32 0.0, %v1033
      %1035 = vmatmul.f32.gmra.mxu0 %v972
      %v1036 = vpop.f32.mrf.mxu0
      %v1037 = vadd.f32 0.0, %v1036
      %1038 = vmatmul.f32.gmra.mxu0 %v975
      %v1039 = vpop.f32.mrf.mxu0
      %v1040 = vadd.f32 0.0, %v1039
      %1041 = vmatmul.f32.gmra.mxu0 %v978
      %v1042 = vpop.f32.mrf.mxu0
      %v1043 = vadd.f32 0.0, %v1042
      %1044 = vdwg.mxu0
      %v1045 = vadd.f32 %v898, %v998
      %v1046 = vadd.f32 %v899, %v1001
      %v1047 = vadd.f32 %v900, %v1004
      %v1048 = vadd.f32 %v901, %v1007
      %v1049 = vadd.f32 %v902, %v1010
      %v1050 = vadd.f32 %v903, %v1013
      %v1051 = vadd.f32 %v904, %v1016
      %v1052 = vadd.f32 %v905, %v1019
      %v1053 = vadd.f32 %v906, %v1022
      %v1054 = vadd.f32 %v907, %v1025
      %v1055 = vadd.f32 %v908, %v1028
      %v1056 = vadd.f32 %v909, %v1031
      %v1057 = vadd.f32 %v910, %v1034
      %v1058 = vadd.f32 %v911, %v1037
      %v1059 = vadd.f32 %v912, %v1040
      %v1060 = vadd.f32 %v913, %v1043
      %s1061 = scalar_lea.vmem %s198, 48
      %v1062 = vld [vmem:[%s1061] sm:$0xff]
      %v1063 = vld [vmem:[%s1061 + $0x8] sm:$0xff]
      %v1064 = vld [vmem:[%s1061 + $0x18] sm:$0xff]
      %v1065 = vld [vmem:[%s1061 + $0x20] sm:$0xff]
      %v1066 = vld [vmem:[%s1061 + $0x30] sm:$0xff]
      %v1067 = vld [vmem:[%s1061 + $0x38] sm:$0xff]
      %v1068 = vld [vmem:[%s1061 + $0x48] sm:$0xff]
      %v1069 = vld [vmem:[%s1061 + $0x50] sm:$0xff]
      %v1070 = vld [vmem:[%s1061 + $0x60] sm:$0xff]
      %v1071 = vld [vmem:[%s1061 + $0x68] sm:$0xff]
      %v1072 = vld [vmem:[%s1061 + $0x78] sm:$0xff]
      %v1073 = vld [vmem:[%s1061 + $0x80] sm:$0xff]
      %v1074 = vld [vmem:[%s1061 + $0x90] sm:$0xff]
      %v1075 = vld [vmem:[%s1061 + $0x98] sm:$0xff]
      %v1076 = vld [vmem:[%s1061 + $0xa8] sm:$0xff]
      %v1077 = vld [vmem:[%s1061 + $0xb0] sm:$0xff]
      %s1078 = scalar_lea.vmem %s1, 48
      %v1079 = vld [vmem:[%s1078] sm:$0xff]
      %v1081 = vsel %vm245, %v1062, 0
      %v1084 = vsel %vm245, %v1063, 0
      %v1087 = vsel %vm245, %v1064, 0
      %v1090 = vsel %vm245, %v1065, 0
      %v1093 = vsel %vm245, %v1066, 0
      %v1096 = vsel %vm245, %v1067, 0
      %v1099 = vsel %vm245, %v1068, 0
      %v1102 = vsel %vm245, %v1069, 0
      %v1105 = vsel %vm245, %v1070, 0
      %v1108 = vsel %vm245, %v1071, 0
      %v1111 = vsel %vm245, %v1072, 0
      %v1114 = vsel %vm245, %v1073, 0
      %v1117 = vsel %vm245, %v1074, 0
      %v1120 = vsel %vm245, %v1075, 0
      %v1123 = vsel %vm245, %v1076, 0
      %v1126 = vsel %vm245, %v1077, 0
      %1128 = vmatpush.msra.mxu0 0.0
      %1129 = vmatpush.msra.mxu0 0.0
      %1130 = vmatpush.msra.mxu0 0.0
      %1131 = vmatpush.msra.mxu0 0.0
      %1132 = vmatpush.msra.mxu0 0.0
      %1133 = vmatpush.msra.mxu0 0.0
      %1134 = vmatpush.msra.mxu0 0.0
      %1135 = vmatpush.msra.mxu0 0.0
      %1136 = vmatpush.msra.mxu0 0.0
      %1137 = vmatpush.msra.mxu0 0.0
      %1138 = vmatpush.msra.mxu0 0.0
      %1139 = vmatpush.msra.mxu0 0.0
      %1140 = vmatpush.msra.mxu0 0.0
      %1141 = vmatpush.msra.mxu0 0.0
      %1142 = vmatpush.msra.mxu0 0.0
      %1143 = vmatpush.msra.mxu0 %v1079
      %1144 = vmatmul.f32.gmra.mxu0 %v1081
      %v1145 = vpop.f32.mrf.mxu0
      %v1146 = vadd.f32 0.0, %v1145
      %1147 = vmatmul.f32.gmra.mxu0 %v1084
      %v1148 = vpop.f32.mrf.mxu0
      %v1149 = vadd.f32 0.0, %v1148
      %1150 = vmatmul.f32.gmra.mxu0 %v1087
      %v1151 = vpop.f32.mrf.mxu0
      %v1152 = vadd.f32 0.0, %v1151
      %1153 = vmatmul.f32.gmra.mxu0 %v1090
      %v1154 = vpop.f32.mrf.mxu0
      %v1155 = vadd.f32 0.0, %v1154
      %1156 = vmatmul.f32.gmra.mxu0 %v1093
      %v1157 = vpop.f32.mrf.mxu0
      %v1158 = vadd.f32 0.0, %v1157
      %1159 = vmatmul.f32.gmra.mxu0 %v1096
      %v1160 = vpop.f32.mrf.mxu0
      %v1161 = vadd.f32 0.0, %v1160
      %1162 = vmatmul.f32.gmra.mxu0 %v1099
      %v1163 = vpop.f32.mrf.mxu0
      %v1164 = vadd.f32 0.0, %v1163
      %1165 = vmatmul.f32.gmra.mxu0 %v1102
      %v1166 = vpop.f32.mrf.mxu0
      %v1167 = vadd.f32 0.0, %v1166
      %1168 = vmatmul.f32.gmra.mxu0 %v1105
      %v1169 = vpop.f32.mrf.mxu0
      %v1170 = vadd.f32 0.0, %v1169
      %1171 = vmatmul.f32.gmra.mxu0 %v1108
      %v1172 = vpop.f32.mrf.mxu0
      %v1173 = vadd.f32 0.0, %v1172
      %1174 = vmatmul.f32.gmra.mxu0 %v1111
      %v1175 = vpop.f32.mrf.mxu0
      %v1176 = vadd.f32 0.0, %v1175
      %1177 = vmatmul.f32.gmra.mxu0 %v1114
      %v1178 = vpop.f32.mrf.mxu0
      %v1179 = vadd.f32 0.0, %v1178
      %1180 = vmatmul.f32.gmra.mxu0 %v1117
      %v1181 = vpop.f32.mrf.mxu0
      %v1182 = vadd.f32 0.0, %v1181
      %1183 = vmatmul.f32.gmra.mxu0 %v1120
      %v1184 = vpop.f32.mrf.mxu0
      %v1185 = vadd.f32 0.0, %v1184
      %1186 = vmatmul.f32.gmra.mxu0 %v1123
      %v1187 = vpop.f32.mrf.mxu0
      %v1188 = vadd.f32 0.0, %v1187
      %1189 = vmatmul.f32.gmra.mxu0 %v1126
      %v1190 = vpop.f32.mrf.mxu0
      %v1191 = vadd.f32 0.0, %v1190
      %1192 = vdwg.mxu0
      %v1193 = vadd.f32 %v1045, %v1146
      %v1194 = vadd.f32 %v1046, %v1149
      %v1195 = vadd.f32 %v1047, %v1152
      %v1196 = vadd.f32 %v1048, %v1155
      %v1197 = vadd.f32 %v1049, %v1158
      %v1198 = vadd.f32 %v1050, %v1161
      %v1199 = vadd.f32 %v1051, %v1164
      %v1200 = vadd.f32 %v1052, %v1167
      %v1201 = vadd.f32 %v1053, %v1170
      %v1202 = vadd.f32 %v1054, %v1173
      %v1203 = vadd.f32 %v1055, %v1176
      %v1204 = vadd.f32 %v1056, %v1179
      %v1205 = vadd.f32 %v1057, %v1182
      %v1206 = vadd.f32 %v1058, %v1185
      %v1207 = vadd.f32 %v1059, %v1188
      %v1208 = vadd.f32 %v1060, %v1191
      %v1209 = vld [vmem:[%s1061 + $0x1] sm:$0xff]
      %v1210 = vld [vmem:[%s1061 + $0x9] sm:$0xff]
      %v1211 = vld [vmem:[%s1061 + $0x19] sm:$0xff]
      %v1212 = vld [vmem:[%s1061 + $0x21] sm:$0xff]
      %v1213 = vld [vmem:[%s1061 + $0x31] sm:$0xff]
      %v1214 = vld [vmem:[%s1061 + $0x39] sm:$0xff]
      %v1215 = vld [vmem:[%s1061 + $0x49] sm:$0xff]
      %v1216 = vld [vmem:[%s1061 + $0x51] sm:$0xff]
      %v1217 = vld [vmem:[%s1061 + $0x61] sm:$0xff]
      %v1218 = vld [vmem:[%s1061 + $0x69] sm:$0xff]
      %v1219 = vld [vmem:[%s1061 + $0x79] sm:$0xff]
      %v1220 = vld [vmem:[%s1061 + $0x81] sm:$0xff]
      %v1221 = vld [vmem:[%s1061 + $0x91] sm:$0xff]
      %v1222 = vld [vmem:[%s1061 + $0x99] sm:$0xff]
      %v1223 = vld [vmem:[%s1061 + $0xa9] sm:$0xff]
      %v1224 = vld [vmem:[%s1061 + $0xb1] sm:$0xff]
      %s1225 = scalar_lea.vmem %s1, 56
      %v1226 = vld [vmem:[%s1225] sm:$0xff]
      %v1228 = vsel %vm245, %v1209, 0
      %v1231 = vsel %vm245, %v1210, 0
      %v1234 = vsel %vm245, %v1211, 0
      %v1237 = vsel %vm245, %v1212, 0
      %v1240 = vsel %vm245, %v1213, 0
      %v1243 = vsel %vm245, %v1214, 0
      %v1246 = vsel %vm245, %v1215, 0
      %v1249 = vsel %vm245, %v1216, 0
      %v1252 = vsel %vm245, %v1217, 0
      %v1255 = vsel %vm245, %v1218, 0
      %v1258 = vsel %vm245, %v1219, 0
      %v1261 = vsel %vm245, %v1220, 0
      %v1264 = vsel %vm245, %v1221, 0
      %v1267 = vsel %vm245, %v1222, 0
      %v1270 = vsel %vm245, %v1223, 0
      %v1273 = vsel %vm245, %v1224, 0
      %1275 = vmatpush.msra.mxu0 0.0
      %1276 = vmatpush.msra.mxu0 0.0
      %1277 = vmatpush.msra.mxu0 0.0
      %1278 = vmatpush.msra.mxu0 0.0
      %1279 = vmatpush.msra.mxu0 0.0
      %1280 = vmatpush.msra.mxu0 0.0
      %1281 = vmatpush.msra.mxu0 0.0
      %1282 = vmatpush.msra.mxu0 0.0
      %1283 = vmatpush.msra.mxu0 0.0
      %1284 = vmatpush.msra.mxu0 0.0
      %1285 = vmatpush.msra.mxu0 0.0
      %1286 = vmatpush.msra.mxu0 0.0
      %1287 = vmatpush.msra.mxu0 0.0
      %1288 = vmatpush.msra.mxu0 0.0
      %1289 = vmatpush.msra.mxu0 0.0
      %1290 = vmatpush.msra.mxu0 %v1226
      %1291 = vmatmul.f32.gmra.mxu0 %v1228
      %v1292 = vpop.f32.mrf.mxu0
      %v1293 = vadd.f32 0.0, %v1292
      %1294 = vmatmul.f32.gmra.mxu0 %v1231
      %v1295 = vpop.f32.mrf.mxu0
      %v1296 = vadd.f32 0.0, %v1295
      %1297 = vmatmul.f32.gmra.mxu0 %v1234
      %v1298 = vpop.f32.mrf.mxu0
      %v1299 = vadd.f32 0.0, %v1298
      %1300 = vmatmul.f32.gmra.mxu0 %v1237
      %v1301 = vpop.f32.mrf.mxu0
      %v1302 = vadd.f32 0.0, %v1301
      %1303 = vmatmul.f32.gmra.mxu0 %v1240
      %v1304 = vpop.f32.mrf.mxu0
      %v1305 = vadd.f32 0.0, %v1304
      %1306 = vmatmul.f32.gmra.mxu0 %v1243
      %v1307 = vpop.f32.mrf.mxu0
      %v1308 = vadd.f32 0.0, %v1307
      %1309 = vmatmul.f32.gmra.mxu0 %v1246
      %v1310 = vpop.f32.mrf.mxu0
      %v1311 = vadd.f32 0.0, %v1310
      %1312 = vmatmul.f32.gmra.mxu0 %v1249
      %v1313 = vpop.f32.mrf.mxu0
      %v1314 = vadd.f32 0.0, %v1313
      %1315 = vmatmul.f32.gmra.mxu0 %v1252
      %v1316 = vpop.f32.mrf.mxu0
      %v1317 = vadd.f32 0.0, %v1316
      %1318 = vmatmul.f32.gmra.mxu0 %v1255
      %v1319 = vpop.f32.mrf.mxu0
      %v1320 = vadd.f32 0.0, %v1319
      %1321 = vmatmul.f32.gmra.mxu0 %v1258
      %v1322 = vpop.f32.mrf.mxu0
      %v1323 = vadd.f32 0.0, %v1322
      %1324 = vmatmul.f32.gmra.mxu0 %v1261
      %v1325 = vpop.f32.mrf.mxu0
      %v1326 = vadd.f32 0.0, %v1325
      %1327 = vmatmul.f32.gmra.mxu0 %v1264
      %v1328 = vpop.f32.mrf.mxu0
      %v1329 = vadd.f32 0.0, %v1328
      %1330 = vmatmul.f32.gmra.mxu0 %v1267
      %v1331 = vpop.f32.mrf.mxu0
      %v1332 = vadd.f32 0.0, %v1331
      %1333 = vmatmul.f32.gmra.mxu0 %v1270
      %v1334 = vpop.f32.mrf.mxu0
      %v1335 = vadd.f32 0.0, %v1334
      %1336 = vmatmul.f32.gmra.mxu0 %v1273
      %v1337 = vpop.f32.mrf.mxu0
      %v1338 = vadd.f32 0.0, %v1337
      %1339 = vdwg.mxu0
      %v1340 = vadd.f32 %v1193, %v1293
      %v1341 = vadd.f32 %v1194, %v1296
      %v1342 = vadd.f32 %v1195, %v1299
      %v1343 = vadd.f32 %v1196, %v1302
      %v1344 = vadd.f32 %v1197, %v1305
      %v1345 = vadd.f32 %v1198, %v1308
      %v1346 = vadd.f32 %v1199, %v1311
      %v1347 = vadd.f32 %v1200, %v1314
      %v1348 = vadd.f32 %v1201, %v1317
      %v1349 = vadd.f32 %v1202, %v1320
      %v1350 = vadd.f32 %v1203, %v1323
      %v1351 = vadd.f32 %v1204, %v1326
      %v1352 = vadd.f32 %v1205, %v1329
      %v1353 = vadd.f32 %v1206, %v1332
      %v1354 = vadd.f32 %v1207, %v1335
      %v1355 = vadd.f32 %v1208, %v1338
      %v1356 = vld [vmem:[%s1061 + $0x2] sm:$0xff]
      %v1357 = vld [vmem:[%s1061 + $0xa] sm:$0xff]
      %v1358 = vld [vmem:[%s1061 + $0x1a] sm:$0xff]
      %v1359 = vld [vmem:[%s1061 + $0x22] sm:$0xff]
      %v1360 = vld [vmem:[%s1061 + $0x32] sm:$0xff]
      %v1361 = vld [vmem:[%s1061 + $0x3a] sm:$0xff]
      %v1362 = vld [vmem:[%s1061 + $0x4a] sm:$0xff]
      %v1363 = vld [vmem:[%s1061 + $0x52] sm:$0xff]
      %v1364 = vld [vmem:[%s1061 + $0x62] sm:$0xff]
      %v1365 = vld [vmem:[%s1061 + $0x6a] sm:$0xff]
      %v1366 = vld [vmem:[%s1061 + $0x7a] sm:$0xff]
      %v1367 = vld [vmem:[%s1061 + $0x82] sm:$0xff]
      %v1368 = vld [vmem:[%s1061 + $0x92] sm:$0xff]
      %v1369 = vld [vmem:[%s1061 + $0x9a] sm:$0xff]
      %v1370 = vld [vmem:[%s1061 + $0xaa] sm:$0xff]
      %v1371 = vld [vmem:[%s1061 + $0xb2] sm:$0xff]
      %s1372 = scalar_lea.vmem %s1, 64
      %v1373 = vld [vmem:[%s1372] sm:$0xff]
      %v1375 = vsel %vm245, %v1356, 0
      %v1378 = vsel %vm245, %v1357, 0
      %v1381 = vsel %vm245, %v1358, 0
      %v1384 = vsel %vm245, %v1359, 0
      %v1387 = vsel %vm245, %v1360, 0
      %v1390 = vsel %vm245, %v1361, 0
      %v1393 = vsel %vm245, %v1362, 0
      %v1396 = vsel %vm245, %v1363, 0
      %v1399 = vsel %vm245, %v1364, 0
      %v1402 = vsel %vm245, %v1365, 0
      %v1405 = vsel %vm245, %v1366, 0
      %v1408 = vsel %vm245, %v1367, 0
      %v1411 = vsel %vm245, %v1368, 0
      %v1414 = vsel %vm245, %v1369, 0
      %v1417 = vsel %vm245, %v1370, 0
      %v1420 = vsel %vm245, %v1371, 0
      %1422 = vmatpush.msra.mxu0 0.0
      %1423 = vmatpush.msra.mxu0 0.0
      %1424 = vmatpush.msra.mxu0 0.0
      %1425 = vmatpush.msra.mxu0 0.0
      %1426 = vmatpush.msra.mxu0 0.0
      %1427 = vmatpush.msra.mxu0 0.0
      %1428 = vmatpush.msra.mxu0 0.0
      %1429 = vmatpush.msra.mxu0 0.0
      %1430 = vmatpush.msra.mxu0 0.0
      %1431 = vmatpush.msra.mxu0 0.0
      %1432 = vmatpush.msra.mxu0 0.0
      %1433 = vmatpush.msra.mxu0 0.0
      %1434 = vmatpush.msra.mxu0 0.0
      %1435 = vmatpush.msra.mxu0 0.0
      %1436 = vmatpush.msra.mxu0 0.0
      %1437 = vmatpush.msra.mxu0 %v1373
      %1438 = vmatmul.f32.gmra.mxu0 %v1375
      %v1439 = vpop.f32.mrf.mxu0
      %v1440 = vadd.f32 0.0, %v1439
      %1441 = vmatmul.f32.gmra.mxu0 %v1378
      %v1442 = vpop.f32.mrf.mxu0
      %v1443 = vadd.f32 0.0, %v1442
      %1444 = vmatmul.f32.gmra.mxu0 %v1381
      %v1445 = vpop.f32.mrf.mxu0
      %v1446 = vadd.f32 0.0, %v1445
      %1447 = vmatmul.f32.gmra.mxu0 %v1384
      %v1448 = vpop.f32.mrf.mxu0
      %v1449 = vadd.f32 0.0, %v1448
      %1450 = vmatmul.f32.gmra.mxu0 %v1387
      %v1451 = vpop.f32.mrf.mxu0
      %v1452 = vadd.f32 0.0, %v1451
      %1453 = vmatmul.f32.gmra.mxu0 %v1390
      %v1454 = vpop.f32.mrf.mxu0
      %v1455 = vadd.f32 0.0, %v1454
      %1456 = vmatmul.f32.gmra.mxu0 %v1393
      %v1457 = vpop.f32.mrf.mxu0
      %v1458 = vadd.f32 0.0, %v1457
      %1459 = vmatmul.f32.gmra.mxu0 %v1396
      %v1460 = vpop.f32.mrf.mxu0
      %v1461 = vadd.f32 0.0, %v1460
      %1462 = vmatmul.f32.gmra.mxu0 %v1399
      %v1463 = vpop.f32.mrf.mxu0
      %v1464 = vadd.f32 0.0, %v1463
      %1465 = vmatmul.f32.gmra.mxu0 %v1402
      %v1466 = vpop.f32.mrf.mxu0
      %v1467 = vadd.f32 0.0, %v1466
      %1468 = vmatmul.f32.gmra.mxu0 %v1405
      %v1469 = vpop.f32.mrf.mxu0
      %v1470 = vadd.f32 0.0, %v1469
      %1471 = vmatmul.f32.gmra.mxu0 %v1408
      %v1472 = vpop.f32.mrf.mxu0
      %v1473 = vadd.f32 0.0, %v1472
      %1474 = vmatmul.f32.gmra.mxu0 %v1411
      %v1475 = vpop.f32.mrf.mxu0
      %v1476 = vadd.f32 0.0, %v1475
      %1477 = vmatmul.f32.gmra.mxu0 %v1414
      %v1478 = vpop.f32.mrf.mxu0
      %v1479 = vadd.f32 0.0, %v1478
      %1480 = vmatmul.f32.gmra.mxu0 %v1417
      %v1481 = vpop.f32.mrf.mxu0
      %v1482 = vadd.f32 0.0, %v1481
      %1483 = vmatmul.f32.gmra.mxu0 %v1420
      %v1484 = vpop.f32.mrf.mxu0
      %v1485 = vadd.f32 0.0, %v1484
      %1486 = vdwg.mxu0
      %v1487 = vadd.f32 %v1340, %v1440
      %v1488 = vadd.f32 %v1341, %v1443
      %v1489 = vadd.f32 %v1342, %v1446
      %v1490 = vadd.f32 %v1343, %v1449
      %v1491 = vadd.f32 %v1344, %v1452
      %v1492 = vadd.f32 %v1345, %v1455
      %v1493 = vadd.f32 %v1346, %v1458
      %v1494 = vadd.f32 %v1347, %v1461
      %v1495 = vadd.f32 %v1348, %v1464
      %v1496 = vadd.f32 %v1349, %v1467
      %v1497 = vadd.f32 %v1350, %v1470
      %v1498 = vadd.f32 %v1351, %v1473
      %v1499 = vadd.f32 %v1352, %v1476
      %v1500 = vadd.f32 %v1353, %v1479
      %v1501 = vadd.f32 %v1354, %v1482
      %v1502 = vadd.f32 %v1355, %v1485
      %v1503 = vld [vmem:[%s2] sm:$0x1]
      %v1505 = vperm.slane %v1503, 0
      %v1507 = vadd.f32 %v1487, %v1505
      %v1508 = vadd.f32 %v1488, %v1505
      %v1509 = vadd.f32 %v1489, %v1505
      %v1510 = vadd.f32 %v1490, %v1505
      %v1511 = vadd.f32 %v1491, %v1505
      %v1512 = vadd.f32 %v1492, %v1505
      %v1513 = vadd.f32 %v1493, %v1505
      %v1514 = vadd.f32 %v1494, %v1505
      %v1515 = vadd.f32 %v1495, %v1505
      %v1516 = vadd.f32 %v1496, %v1505
      %v1517 = vadd.f32 %v1497, %v1505
      %v1518 = vadd.f32 %v1498, %v1505
      %v1519 = vadd.f32 %v1499, %v1505
      %v1520 = vadd.f32 %v1500, %v1505
      %v1521 = vadd.f32 %v1501, %v1505
      %v1522 = vadd.f32 %v1502, %v1505
      %v1523 = vmax.f32 %v1507, 0.0
      %v1524 = vmax.f32 %v1508, 0.0
      %v1525 = vmax.f32 %v1509, 0.0
      %v1526 = vmax.f32 %v1510, 0.0
      %v1527 = vmax.f32 %v1511, 0.0
      %v1528 = vmax.f32 %v1512, 0.0
      %v1529 = vmax.f32 %v1513, 0.0
      %v1530 = vmax.f32 %v1514, 0.0
      %v1531 = vmax.f32 %v1515, 0.0
      %v1532 = vmax.f32 %v1516, 0.0
      %v1533 = vmax.f32 %v1517, 0.0
      %v1534 = vmax.f32 %v1518, 0.0
      %v1535 = vmax.f32 %v1519, 0.0
      %v1536 = vmax.f32 %v1520, 0.0
      %v1537 = vmax.f32 %v1521, 0.0
      %v1538 = vmax.f32 %v1522, 0.0
      %1539 = vst.msk [vmem:[%s208] sm:$0xff] %vm245, %v1523
      %1540 = vst.msk [vmem:[%s208 + $0x8] sm:$0xff] %vm245, %v1524
      %1541 = vst.msk [vmem:[%s208 + $0x10] sm:$0xff] %vm245, %v1525
      %1542 = vst.msk [vmem:[%s208 + $0x18] sm:$0xff] %vm245, %v1526
      %1543 = vst.msk [vmem:[%s208 + $0x20] sm:$0xff] %vm245, %v1527
      %1544 = vst.msk [vmem:[%s208 + $0x28] sm:$0xff] %vm245, %v1528
      %1545 = vst.msk [vmem:[%s208 + $0x30] sm:$0xff] %vm245, %v1529
      %1546 = vst.msk [vmem:[%s208 + $0x38] sm:$0xff] %vm245, %v1530
      %1547 = vst.msk [vmem:[%s208 + $0x40] sm:$0xff] %vm245, %v1531
      %1548 = vst.msk [vmem:[%s208 + $0x48] sm:$0xff] %vm245, %v1532
      %1549 = vst.msk [vmem:[%s208 + $0x50] sm:$0xff] %vm245, %v1533
      %1550 = vst.msk [vmem:[%s208 + $0x58] sm:$0xff] %vm245, %v1534
      %1551 = vst.msk [vmem:[%s208 + $0x60] sm:$0xff] %vm245, %v1535
      %1552 = vst.msk [vmem:[%s208 + $0x68] sm:$0xff] %vm245, %v1536
      %1553 = vst.msk [vmem:[%s208 + $0x70] sm:$0xff] %vm245, %v1537
      %1554 = vst.msk [vmem:[%s208 + $0x78] sm:$0xff] %vm245, %v1538
      %s1555 = smul.u32 8, %s19
      %p1556 = scmp.lt.s32.totalorder %s18, 1
      %s1557 = scalar_select %p1556, %s18, 1
      %p1558 = scmp.lt.s32.totalorder %s1555, 15
      %s1559 = scalar_select %p1558, %s1555, 15
      %s1560 = smul.addr %s1559, 2
      %s1561 = smul.addr %s1557, 32
      %s1562 = sadd.s32 %s1560, %s1561
      %s1563 = smul.addr %s1562, 8
      %s1564 = scalar_lea.vmem %s3, %s1563
      // Predicated region
      $region33: #{tpu_custom_call.1} parent=31 // pred_check
        %p1565 = pneg %p116
      $region34: #{tpu_custom_call.1} parent=31 // pred_check_branch
        %1567 = sbr.rel (%p1565) target = $region36
      $region35: #{tpu_custom_call.1} parent=31 // pred_region
        %s1568 = smul.u32 8, %s19
      $region36: #{tpu_custom_call.1} parent=31 // pred_fallthru
        _
    $region32: #{tpu_custom_call.1} parent=5 // pred_fallthru
      _
    %p1569 = scmp.le.s32.totalorder 2, %s9
    // Predicated region
    $region37: #{tpu_custom_call.1} parent=5 // pred_check
      %p1570 = pneg %p1569
    $region38: #{tpu_custom_call.1} parent=5 // pred_check_branch
      %1572 = sbr.rel (%p1570) target = $region40
    $region39: #{tpu_custom_call.1} parent=5 // pred_region
      %s1573 = ssub.s32 %s9, 2
      // Predicated region
      $region41: #{tpu_custom_call.1} parent=39 // pred_check
        %p1574 = pneg %p122
      $region42: #{tpu_custom_call.1} parent=39 // pred_check_branch
        %1576 = sbr.rel (%p1574) target = $region44
      $region43: #{tpu_custom_call.1} parent=39 // pred_region
        %s1577 = smul.u32 8, %s21
        %p1578 = scmp.lt.s32.totalorder %s20, 1
        %s1579 = scalar_select %p1578, %s20, 1
        %p1580 = scmp.lt.s32.totalorder %s1577, 15
        %s1581 = scalar_select %p1580, %s1577, 15
        %s1582 = smul.addr %s1581, 2
        %s1583 = smul.addr %s1579, 32
        %s1584 = sadd.s32 %s1582, %s1583
        %s1585 = smul.addr %s1584, 8
        %s1586 = scalar_lea.vmem %s3, %s1585
      $region44: #{tpu_custom_call.1} parent=39 // pred_fallthru
        _
    $region40: #{tpu_custom_call.1} parent=5 // pred_fallthru
      _
  $region6: #{tpu_custom_call.1} parent=0 // loop_footer
    %s13 = sadd.s32 1, %s9
  $region7: #{tpu_custom_call.1} parent=0 // loop_footer_branch
    %8 = sbr.rel target = $region3
  $region8: #{tpu_custom_call.1} parent=0 // loop_exit
    _

</llo_original>
